<compile_context>
chip_gen: v7x
topology: tpu7x:2x2x1
jax: 0.10.0
libtpu: 0.0.40
codegen_flags: <defaults>
</compile_context>

<pallas_src>
import numpy as np
import jax
import jax.numpy as jnp
from jax import lax
from jax.experimental import pallas as pl
from jax.experimental.pallas import tpu as pltpu


# ------------------------------ fused kernel ---------------------------------

def _make_fused_kernel(W, n_rest):
    """Fused EPINET_D kernel for (original) image width W.

    Per grid step (= one batch element) operand layout:
      x_ref:    (1, Cin_p, HW)     input, H*W on lanes (channels zero-padded to Cin_p)
      wf0_ref:  (C, 4*Cin_p)       fused dw+pw weights of layer 0 (multistream1)
      wfr_ref:  (n_rest, C, 4*C)   fused dw+pw weights of the remaining DWSC blocks
                                   (multistream2/3, concatenated_conv1..7, last_conv dw+pw)
      wfin_ref: (1, 4*C)           final 2x2 conv weights, tap-major
      bias_ref: (1,)  SMEM         final conv bias
      o_ref:    (1, 1, HW)         output, lane-dense; valid region = top-left (H-12)x(W-12)
    """

    def kernel(x_ref, wf0_ref, wfr_ref, wfin_ref, bias_ref, o_ref):
        hw = x_ref.shape[2]

        def tap_slab(a):
            # a: (Ci, HW) -> (4*Ci, HW) with rows
            #   [0:Ci]     a[c, j]        tap (0,0)
            #   [Ci:2Ci]   a[c, j+1]      tap (0,1)
            #   [2Ci:3Ci]  a[c, j+W]      tap (1,0)
            #   [3Ci:4Ci]  a[c, j+W+1]    tap (1,1)
            # pltpu.roll matches jnp.roll, so shift = HW - k gives
            # result[:, j] = a[:, (j + k) % HW]; wrapped columns only ever land
            # in the invalid bottom/right margin that no later layer reads.
            s1  = pltpu.roll(a, shift=hw - 1, axis=1)       # XLU, not vld/vst
            sW  = pltpu.roll(a, shift=hw - W, axis=1)
            sW1 = pltpu.roll(a, shift=hw - W - 1, axis=1)
            return jnp.concatenate([a, s1, sW, sW1], axis=0)

        def dwsc(a, wf):
            # One DWSC block == one MXU matmul (K = 4*Ci, lane-dense N = HW):
            #   z[o, j] = relu( sum_{tap,c} wf[o, tap*Ci + c] * a[c, j + off_tap] )
            z = jnp.dot(wf, tap_slab(a), preferred_element_type=jnp.float32)
            return jnp.maximum(z, 0.0).astype(a.dtype)

        x = x_ref[0]                               # (Cin_p, HW)
        x = dwsc(x, wf0_ref[...])                  # multistream1
        for i in range(n_rest):                    # remaining 10 DWSC blocks (incl. last_conv dw+pw+relu)
            x = dwsc(x, wfr_ref[i])

        # final 2x2 full conv (C -> 1) + bias: one (1, 4C) x (4C, HW) matmul,
        # stored lane-dense (HW on lanes).
        out = jnp.dot(wfin_ref[...], tap_slab(x), preferred_element_type=jnp.float32)
        o_ref[0] = (out + bias_ref[0]).astype(o_ref.dtype)

    return kernel


# -------------------------------- wrapper -------------------------------------

def _fuse_dw_pw(wdw, wpw):
    """(2,2,Ci) depthwise taps + (Ci,Co) pointwise -> (Co, 4*Ci) fused weight.

    Wf[o, tap*Ci + c] = wdw[tap, c] * wpw[c, o]   (tap order (0,0),(0,1),(1,0),(1,1))
    """
    ci, co = wpw.shape
    wf = (wdw.reshape(4, ci)[:, :, None] * wpw[None, :, :]).reshape(4 * ci, co)
    return wf.T


def epinet_d_forward(x_nchw, layers, last, compute_dtype=jnp.float32):
    """x_nchw: (N, input_ch, H, W) -> (N, 1, H-12, W-12)  (PyTorch NCHW semantics).

    compute_dtype: f32 default (right for v5e's VPU); bf16 recommended on
    v6e/v7x — matmuls always accumulate in f32 via preferred_element_type.
    """
    N, cin, H, W = x_nchw.shape
    hw = H * W
    C = layers[-1][1].shape[1]                      # filter_num * stream_num
    cin_p = int(max(8, -(-cin // 8) * 8))           # sublane-align the layer-0 tap slab

    # NCHW -> (N, Cin_p, H*W): pure reshape + zero channel pad; H*W lands on lanes.
    x = x_nchw.reshape(N, cin, hw).astype(compute_dtype)
    x = jnp.pad(x, ((0, 0), (0, cin_p - cin), (0, 0)))

    wdw0, wpw0 = layers[0]
    wdw0 = jnp.pad(wdw0, ((0, 0), (0, 0), (0, cin_p - cin)))
    wpw0 = jnp.pad(wpw0, ((0, cin_p - cin), (0, 0)))
    wf0 = _fuse_dw_pw(wdw0, wpw0).astype(compute_dtype)                     # (C, 4*cin_p)
    wfr = jnp.stack([_fuse_dw_pw(w, p) for (w, p) in layers[1:]]
                    + [_fuse_dw_pw(last["wdw"], last["wpw"])]
                    ).astype(compute_dtype)                                 # (n_rest, C, 4*C)
    wfin = last["wfin"].reshape(1, 4 * C).astype(compute_dtype)             # tap-major
    bias = last["bias"].astype(jnp.float32)

    n_rest = wfr.shape[0]
    kernel = _make_fused_kernel(W=W, n_rest=n_rest)
    out = pl.pallas_call(
        kernel,
        out_shape=jax.ShapeDtypeStruct((N, 1, hw), jnp.float32),
        grid=(N,),
        in_specs=[
            pl.BlockSpec((1, cin_p, hw), lambda n: (n, 0, 0)),       # per-batch activations
            # weights: full-array blocks, constant index -> DMA'd once, VMEM-resident
            pl.BlockSpec((C, 4 * cin_p), lambda n: (0, 0)),
            pl.BlockSpec((n_rest, C, 4 * C), lambda n: (0, 0, 0)),
            pl.BlockSpec((1, 4 * C), lambda n: (0, 0)),
            pl.BlockSpec(memory_space=pltpu.MemorySpace.SMEM),       # bias scalar
        ],
        out_specs=pl.BlockSpec((1, 1, hw), lambda n: (n, 0, 0)),     # lane-dense store
        compiler_params=pltpu.CompilerParams(
            dimension_semantics=("parallel",)),                      # megacore sharding on v7x
    )(x, wf0, wfr, wfin, bias)

    Ho, Wo = H - 12, W - 12
    out = out.reshape(N, H, W)[:, :Ho, :Wo]              # extract valid region (XLA side)
    return out[:, None, :, :].astype(x_nchw.dtype)       # (N, 1, H-12, W-12) NCHW


# ------------------------- params / reference ---------------------------------

def init_params(key, input_ch, filter_num, stream_num):
    fc = filter_num * stream_num
    chans = ([(input_ch, filter_num), (filter_num, filter_num), (filter_num, filter_num)]
             + [(fc, fc)] * 7)
    layers = []
    for ci, co in chans:
        key, k1, k2 = jax.random.split(key, 3)
        wdw = jax.random.normal(k1, (2, 2, ci), jnp.float32) * 0.5
        wpw = jax.random.normal(k2, (ci, co), jnp.float32) * np.sqrt(2.0 / ci)
        layers.append((wdw, wpw))
    key, k1, k2, k3, k4 = jax.random.split(key, 5)
    last = dict(
        wdw=jax.random.normal(k1, (2, 2, fc), jnp.float32) * 0.5,
        wpw=jax.random.normal(k2, (fc, fc), jnp.float32) * np.sqrt(2.0 / fc),
        wfin=jax.random.normal(k3, (2, 2, fc), jnp.float32) * 0.1,
        bias=jax.random.normal(k4, (1,), jnp.float32) * 0.1,
    )
    return layers, last


def ref_forward(x_nchw, layers, last):
    """Pure-JAX reference using lax.conv (same semantics as the PyTorch module)."""
    dn = ("NHWC", "HWIO", "NHWC")
    x = jnp.transpose(x_nchw, (0, 2, 3, 1))
    for wdw, wpw in layers:
        ci, co = wpw.shape
        x = lax.conv_general_dilated(x, wdw.reshape(2, 2, 1, ci), (1, 1), "VALID",
                                     dimension_numbers=dn, feature_group_count=ci)
        x = lax.conv_general_dilated(x, wpw.reshape(1, 1, ci, co), (1, 1), "VALID",
                                     dimension_numbers=dn)
        x = jnp.maximum(x, 0.0)
    ci = last["wdw"].shape[-1]
    x = lax.conv_general_dilated(x, last["wdw"].reshape(2, 2, 1, ci), (1, 1), "VALID",
                                 dimension_numbers=dn, feature_group_count=ci)
    x = lax.conv_general_dilated(x, last["wpw"].reshape(1, 1, ci, ci), (1, 1), "VALID",
                                 dimension_numbers=dn)
    x = jnp.maximum(x, 0.0)
    x = lax.conv_general_dilated(x, last["wfin"].reshape(2, 2, ci, 1), (1, 1), "VALID",
                                 dimension_numbers=dn) + last["bias"]
    return jnp.transpose(x, (0, 3, 1, 2))


# --------------------------------- main ----------------------------------------

if __name__ == "__main__":
    key = jax.random.PRNGKey(0)
    N, input_ch, H, W = 2, 4, 16, 16
    filter_num, stream_num = 32, 1   # stream_num must be 1 for the forward to typecheck

    kx, kp = jax.random.split(key)
    x = jax.random.normal(kx, (N, input_ch, H, W), jnp.float32)
    layers, last = init_params(kp, input_ch, filter_num, stream_num)

    fwd = jax.jit(lambda xx: epinet_d_forward(xx, layers, last))
    out = jax.block_until_ready(fwd(x))

    assert out.shape == (N, 1, H - 12, W - 12), out.shape
    ref = ref_forward(x, layers, last)
    np.testing.assert_allclose(np.asarray(out), np.asarray(ref), rtol=1e-4, atol=1e-4)

    print("KERNEL_OK")
</pallas_src>

<mosaic_0001>
module attributes {stable_mosaic.version = 11 : i64} {
  func.func @kernel(%arg0: i32, %arg1: memref<1x8x256xf32, #tpu.memory_space<vmem>>, %arg2: memref<32x32xf32, #tpu.memory_space<vmem>>, %arg3: memref<10x32x128xf32, #tpu.memory_space<vmem>>, %arg4: memref<1x128xf32, #tpu.memory_space<vmem>>, %arg5: memref<1xf32, #tpu.memory_space<smem>>, %arg6: memref<1x1x256xf32, #tpu.memory_space<vmem>>) attributes {dimension_semantics = [#tpu.dimension_semantics<parallel>], iteration_bounds = array<i64: 2>, scalar_prefetch = 0 : i64, scratch_operands = 0 : i64, tpu.core_type = #tpu.core_type<tc>, window_params = [{transform_indices = @transform_0, window_bounds = array<i64: 1, 8, 256>}, {pipeline_mode = #tpu.pipeline_mode<synchronous>, transform_indices = @transform_1, window_bounds = array<i64: 32, 32>}, {pipeline_mode = #tpu.pipeline_mode<synchronous>, transform_indices = @transform_2, window_bounds = array<i64: 10, 32, 128>}, {pipeline_mode = #tpu.pipeline_mode<synchronous>, transform_indices = @transform_3, window_bounds = array<i64: 1, 128>}, {transform_indices = @transform_4, window_bounds = array<i64: 1>}, {transform_indices = @transform_5, window_bounds = array<i64: 1, 1, 256>}]} {
    %c0 = arith.constant 0 : index
    %c0_0 = arith.constant 0 : index
    %c0_1 = arith.constant 0 : index
    %0 = vector.load %arg1[%c0, %c0_0, %c0_1] : memref<1x8x256xf32, #tpu.memory_space<vmem>>, vector<1x8x256xf32>
    %1 = vector.shape_cast %0 : vector<1x8x256xf32> to vector<8x256xf32>
    %c0_2 = arith.constant 0 : index
    %c0_3 = arith.constant 0 : index
    %2 = vector.load %arg2[%c0_2, %c0_3] : memref<32x32xf32, #tpu.memory_space<vmem>>, vector<32x32xf32>
    %c255_i32 = arith.constant 255 : i32
    %3 = tpu.dynamic_rotate %1 by %c255_i32 dim 1 : vector<8x256xf32>, i32 -> vector<8x256xf32>
    %c240_i32 = arith.constant 240 : i32
    %4 = tpu.dynamic_rotate %1 by %c240_i32 dim 1 : vector<8x256xf32>, i32 -> vector<8x256xf32>
    %c239_i32 = arith.constant 239 : i32
    %5 = tpu.dynamic_rotate %1 by %c239_i32 dim 1 : vector<8x256xf32>, i32 -> vector<8x256xf32>
    %6 = tpu.concatenate %1, %3, %4, %5 in 0 : vector<8x256xf32>, vector<8x256xf32>, vector<8x256xf32>, vector<8x256xf32> -> vector<32x256xf32>
    %cst = arith.constant dense<0.000000e+00> : vector<32x256xf32>
    %7 = tpu.matmul %2, %6, %cst {dimension_numbers = #tpu.dot_dimension_numbers<[1], [0], [0], [1], [0, 0, 1, 1], [], []>} : vector<32x32xf32>, vector<32x256xf32>, vector<32x256xf32> -> vector<32x256xf32>
    %cst_4 = arith.constant 0.000000e+00 : f32
    %8 = vector.broadcast %cst_4 : f32 to vector<32x256xf32>
    %9 = arith.maximumf %7, %8 : vector<32x256xf32>
    %c0_5 = arith.constant 0 : index
    %c0_6 = arith.constant 0 : index
    %c0_7 = arith.constant 0 : index
    %10 = vector.load %arg3[%c0_5, %c0_6, %c0_7] : memref<10x32x128xf32, #tpu.memory_space<vmem>>, vector<1x32x128xf32>
    %11 = vector.shape_cast %10 : vector<1x32x128xf32> to vector<32x128xf32>
    %c255_i32_8 = arith.constant 255 : i32
    %12 = tpu.dynamic_rotate %9 by %c255_i32_8 dim 1 : vector<32x256xf32>, i32 -> vector<32x256xf32>
    %c240_i32_9 = arith.constant 240 : i32
    %13 = tpu.dynamic_rotate %9 by %c240_i32_9 dim 1 : vector<32x256xf32>, i32 -> vector<32x256xf32>
    %c239_i32_10 = arith.constant 239 : i32
    %14 = tpu.dynamic_rotate %9 by %c239_i32_10 dim 1 : vector<32x256xf32>, i32 -> vector<32x256xf32>
    %15 = tpu.concatenate %9, %12, %13, %14 in 0 : vector<32x256xf32>, vector<32x256xf32>, vector<32x256xf32>, vector<32x256xf32> -> vector<128x256xf32>
    %cst_11 = arith.constant dense<0.000000e+00> : vector<32x256xf32>
    %16 = tpu.matmul %11, %15, %cst_11 {dimension_numbers = #tpu.dot_dimension_numbers<[1], [0], [0], [1], [0, 0, 1, 1], [], []>} : vector<32x128xf32>, vector<128x256xf32>, vector<32x256xf32> -> vector<32x256xf32>
    %cst_12 = arith.constant 0.000000e+00 : f32
    %17 = vector.broadcast %cst_12 : f32 to vector<32x256xf32>
    %18 = arith.maximumf %16, %17 : vector<32x256xf32>
    %c1 = arith.constant 1 : index
    %c0_13 = arith.constant 0 : index
    %c0_14 = arith.constant 0 : index
    %19 = vector.load %arg3[%c1, %c0_13, %c0_14] : memref<10x32x128xf32, #tpu.memory_space<vmem>>, vector<1x32x128xf32>
    %20 = vector.shape_cast %19 : vector<1x32x128xf32> to vector<32x128xf32>
    %c255_i32_15 = arith.constant 255 : i32
    %21 = tpu.dynamic_rotate %18 by %c255_i32_15 dim 1 : vector<32x256xf32>, i32 -> vector<32x256xf32>
    %c240_i32_16 = arith.constant 240 : i32
    %22 = tpu.dynamic_rotate %18 by %c240_i32_16 dim 1 : vector<32x256xf32>, i32 -> vector<32x256xf32>
    %c239_i32_17 = arith.constant 239 : i32
    %23 = tpu.dynamic_rotate %18 by %c239_i32_17 dim 1 : vector<32x256xf32>, i32 -> vector<32x256xf32>
    %24 = tpu.concatenate %18, %21, %22, %23 in 0 : vector<32x256xf32>, vector<32x256xf32>, vector<32x256xf32>, vector<32x256xf32> -> vector<128x256xf32>
    %cst_18 = arith.constant dense<0.000000e+00> : vector<32x256xf32>
    %25 = tpu.matmul %20, %24, %cst_18 {dimension_numbers = #tpu.dot_dimension_numbers<[1], [0], [0], [1], [0, 0, 1, 1], [], []>} : vector<32x128xf32>, vector<128x256xf32>, vector<32x256xf32> -> vector<32x256xf32>
    %cst_19 = arith.constant 0.000000e+00 : f32
    %26 = vector.broadcast %cst_19 : f32 to vector<32x256xf32>
    %27 = arith.maximumf %25, %26 : vector<32x256xf32>
    %c2 = arith.constant 2 : index
    %c0_20 = arith.constant 0 : index
    %c0_21 = arith.constant 0 : index
    %28 = vector.load %arg3[%c2, %c0_20, %c0_21] : memref<10x32x128xf32, #tpu.memory_space<vmem>>, vector<1x32x128xf32>
    %29 = vector.shape_cast %28 : vector<1x32x128xf32> to vector<32x128xf32>
    %c255_i32_22 = arith.constant 255 : i32
    %30 = tpu.dynamic_rotate %27 by %c255_i32_22 dim 1 : vector<32x256xf32>, i32 -> vector<32x256xf32>
    %c240_i32_23 = arith.constant 240 : i32
    %31 = tpu.dynamic_rotate %27 by %c240_i32_23 dim 1 : vector<32x256xf32>, i32 -> vector<32x256xf32>
    %c239_i32_24 = arith.constant 239 : i32
    %32 = tpu.dynamic_rotate %27 by %c239_i32_24 dim 1 : vector<32x256xf32>, i32 -> vector<32x256xf32>
    %33 = tpu.concatenate %27, %30, %31, %32 in 0 : vector<32x256xf32>, vector<32x256xf32>, vector<32x256xf32>, vector<32x256xf32> -> vector<128x256xf32>
    %cst_25 = arith.constant dense<0.000000e+00> : vector<32x256xf32>
    %34 = tpu.matmul %29, %33, %cst_25 {dimension_numbers = #tpu.dot_dimension_numbers<[1], [0], [0], [1], [0, 0, 1, 1], [], []>} : vector<32x128xf32>, vector<128x256xf32>, vector<32x256xf32> -> vector<32x256xf32>
    %cst_26 = arith.constant 0.000000e+00 : f32
    %35 = vector.broadcast %cst_26 : f32 to vector<32x256xf32>
    %36 = arith.maximumf %34, %35 : vector<32x256xf32>
    %c3 = arith.constant 3 : index
    %c0_27 = arith.constant 0 : index
    %c0_28 = arith.constant 0 : index
    %37 = vector.load %arg3[%c3, %c0_27, %c0_28] : memref<10x32x128xf32, #tpu.memory_space<vmem>>, vector<1x32x128xf32>
    %38 = vector.shape_cast %37 : vector<1x32x128xf32> to vector<32x128xf32>
    %c255_i32_29 = arith.constant 255 : i32
    %39 = tpu.dynamic_rotate %36 by %c255_i32_29 dim 1 : vector<32x256xf32>, i32 -> vector<32x256xf32>
    %c240_i32_30 = arith.constant 240 : i32
    %40 = tpu.dynamic_rotate %36 by %c240_i32_30 dim 1 : vector<32x256xf32>, i32 -> vector<32x256xf32>
    %c239_i32_31 = arith.constant 239 : i32
    %41 = tpu.dynamic_rotate %36 by %c239_i32_31 dim 1 : vector<32x256xf32>, i32 -> vector<32x256xf32>
    %42 = tpu.concatenate %36, %39, %40, %41 in 0 : vector<32x256xf32>, vector<32x256xf32>, vector<32x256xf32>, vector<32x256xf32> -> vector<128x256xf32>
    %cst_32 = arith.constant dense<0.000000e+00> : vector<32x256xf32>
    %43 = tpu.matmul %38, %42, %cst_32 {dimension_numbers = #tpu.dot_dimension_numbers<[1], [0], [0], [1], [0, 0, 1, 1], [], []>} : vector<32x128xf32>, vector<128x256xf32>, vector<32x256xf32> -> vector<32x256xf32>
    %cst_33 = arith.constant 0.000000e+00 : f32
    %44 = vector.broadcast %cst_33 : f32 to vector<32x256xf32>
    %45 = arith.maximumf %43, %44 : vector<32x256xf32>
    %c4 = arith.constant 4 : index
    %c0_34 = arith.constant 0 : index
    %c0_35 = arith.constant 0 : index
    %46 = vector.load %arg3[%c4, %c0_34, %c0_35] : memref<10x32x128xf32, #tpu.memory_space<vmem>>, vector<1x32x128xf32>
    %47 = vector.shape_cast %46 : vector<1x32x128xf32> to vector<32x128xf32>
    %c255_i32_36 = arith.constant 255 : i32
    %48 = tpu.dynamic_rotate %45 by %c255_i32_36 dim 1 : vector<32x256xf32>, i32 -> vector<32x256xf32>
    %c240_i32_37 = arith.constant 240 : i32
    %49 = tpu.dynamic_rotate %45 by %c240_i32_37 dim 1 : vector<32x256xf32>, i32 -> vector<32x256xf32>
    %c239_i32_38 = arith.constant 239 : i32
    %50 = tpu.dynamic_rotate %45 by %c239_i32_38 dim 1 : vector<32x256xf32>, i32 -> vector<32x256xf32>
    %51 = tpu.concatenate %45, %48, %49, %50 in 0 : vector<32x256xf32>, vector<32x256xf32>, vector<32x256xf32>, vector<32x256xf32> -> vector<128x256xf32>
    %cst_39 = arith.constant dense<0.000000e+00> : vector<32x256xf32>
    %52 = tpu.matmul %47, %51, %cst_39 {dimension_numbers = #tpu.dot_dimension_numbers<[1], [0], [0], [1], [0, 0, 1, 1], [], []>} : vector<32x128xf32>, vector<128x256xf32>, vector<32x256xf32> -> vector<32x256xf32>
    %cst_40 = arith.constant 0.000000e+00 : f32
    %53 = vector.broadcast %cst_40 : f32 to vector<32x256xf32>
    %54 = arith.maximumf %52, %53 : vector<32x256xf32>
    %c5 = arith.constant 5 : index
    %c0_41 = arith.constant 0 : index
    %c0_42 = arith.constant 0 : index
    %55 = vector.load %arg3[%c5, %c0_41, %c0_42] : memref<10x32x128xf32, #tpu.memory_space<vmem>>, vector<1x32x128xf32>
    %56 = vector.shape_cast %55 : vector<1x32x128xf32> to vector<32x128xf32>
    %c255_i32_43 = arith.constant 255 : i32
    %57 = tpu.dynamic_rotate %54 by %c255_i32_43 dim 1 : vector<32x256xf32>, i32 -> vector<32x256xf32>
    %c240_i32_44 = arith.constant 240 : i32
    %58 = tpu.dynamic_rotate %54 by %c240_i32_44 dim 1 : vector<32x256xf32>, i32 -> vector<32x256xf32>
    %c239_i32_45 = arith.constant 239 : i32
    %59 = tpu.dynamic_rotate %54 by %c239_i32_45 dim 1 : vector<32x256xf32>, i32 -> vector<32x256xf32>
    %60 = tpu.concatenate %54, %57, %58, %59 in 0 : vector<32x256xf32>, vector<32x256xf32>, vector<32x256xf32>, vector<32x256xf32> -> vector<128x256xf32>
    %cst_46 = arith.constant dense<0.000000e+00> : vector<32x256xf32>
    %61 = tpu.matmul %56, %60, %cst_46 {dimension_numbers = #tpu.dot_dimension_numbers<[1], [0], [0], [1], [0, 0, 1, 1], [], []>} : vector<32x128xf32>, vector<128x256xf32>, vector<32x256xf32> -> vector<32x256xf32>
    %cst_47 = arith.constant 0.000000e+00 : f32
    %62 = vector.broadcast %cst_47 : f32 to vector<32x256xf32>
    %63 = arith.maximumf %61, %62 : vector<32x256xf32>
    %c6 = arith.constant 6 : index
    %c0_48 = arith.constant 0 : index
    %c0_49 = arith.constant 0 : index
    %64 = vector.load %arg3[%c6, %c0_48, %c0_49] : memref<10x32x128xf32, #tpu.memory_space<vmem>>, vector<1x32x128xf32>
    %65 = vector.shape_cast %64 : vector<1x32x128xf32> to vector<32x128xf32>
    %c255_i32_50 = arith.constant 255 : i32
    %66 = tpu.dynamic_rotate %63 by %c255_i32_50 dim 1 : vector<32x256xf32>, i32 -> vector<32x256xf32>
    %c240_i32_51 = arith.constant 240 : i32
    %67 = tpu.dynamic_rotate %63 by %c240_i32_51 dim 1 : vector<32x256xf32>, i32 -> vector<32x256xf32>
    %c239_i32_52 = arith.constant 239 : i32
    %68 = tpu.dynamic_rotate %63 by %c239_i32_52 dim 1 : vector<32x256xf32>, i32 -> vector<32x256xf32>
    %69 = tpu.concatenate %63, %66, %67, %68 in 0 : vector<32x256xf32>, vector<32x256xf32>, vector<32x256xf32>, vector<32x256xf32> -> vector<128x256xf32>
    %cst_53 = arith.constant dense<0.000000e+00> : vector<32x256xf32>
    %70 = tpu.matmul %65, %69, %cst_53 {dimension_numbers = #tpu.dot_dimension_numbers<[1], [0], [0], [1], [0, 0, 1, 1], [], []>} : vector<32x128xf32>, vector<128x256xf32>, vector<32x256xf32> -> vector<32x256xf32>
    %cst_54 = arith.constant 0.000000e+00 : f32
    %71 = vector.broadcast %cst_54 : f32 to vector<32x256xf32>
    %72 = arith.maximumf %70, %71 : vector<32x256xf32>
    %c7 = arith.constant 7 : index
    %c0_55 = arith.constant 0 : index
    %c0_56 = arith.constant 0 : index
    %73 = vector.load %arg3[%c7, %c0_55, %c0_56] : memref<10x32x128xf32, #tpu.memory_space<vmem>>, vector<1x32x128xf32>
    %74 = vector.shape_cast %73 : vector<1x32x128xf32> to vector<32x128xf32>
    %c255_i32_57 = arith.constant 255 : i32
    %75 = tpu.dynamic_rotate %72 by %c255_i32_57 dim 1 : vector<32x256xf32>, i32 -> vector<32x256xf32>
    %c240_i32_58 = arith.constant 240 : i32
    %76 = tpu.dynamic_rotate %72 by %c240_i32_58 dim 1 : vector<32x256xf32>, i32 -> vector<32x256xf32>
    %c239_i32_59 = arith.constant 239 : i32
    %77 = tpu.dynamic_rotate %72 by %c239_i32_59 dim 1 : vector<32x256xf32>, i32 -> vector<32x256xf32>
    %78 = tpu.concatenate %72, %75, %76, %77 in 0 : vector<32x256xf32>, vector<32x256xf32>, vector<32x256xf32>, vector<32x256xf32> -> vector<128x256xf32>
    %cst_60 = arith.constant dense<0.000000e+00> : vector<32x256xf32>
    %79 = tpu.matmul %74, %78, %cst_60 {dimension_numbers = #tpu.dot_dimension_numbers<[1], [0], [0], [1], [0, 0, 1, 1], [], []>} : vector<32x128xf32>, vector<128x256xf32>, vector<32x256xf32> -> vector<32x256xf32>
    %cst_61 = arith.constant 0.000000e+00 : f32
    %80 = vector.broadcast %cst_61 : f32 to vector<32x256xf32>
    %81 = arith.maximumf %79, %80 : vector<32x256xf32>
    %c8 = arith.constant 8 : index
    %c0_62 = arith.constant 0 : index
    %c0_63 = arith.constant 0 : index
    %82 = vector.load %arg3[%c8, %c0_62, %c0_63] : memref<10x32x128xf32, #tpu.memory_space<vmem>>, vector<1x32x128xf32>
    %83 = vector.shape_cast %82 : vector<1x32x128xf32> to vector<32x128xf32>
    %c255_i32_64 = arith.constant 255 : i32
    %84 = tpu.dynamic_rotate %81 by %c255_i32_64 dim 1 : vector<32x256xf32>, i32 -> vector<32x256xf32>
    %c240_i32_65 = arith.constant 240 : i32
    %85 = tpu.dynamic_rotate %81 by %c240_i32_65 dim 1 : vector<32x256xf32>, i32 -> vector<32x256xf32>
    %c239_i32_66 = arith.constant 239 : i32
    %86 = tpu.dynamic_rotate %81 by %c239_i32_66 dim 1 : vector<32x256xf32>, i32 -> vector<32x256xf32>
    %87 = tpu.concatenate %81, %84, %85, %86 in 0 : vector<32x256xf32>, vector<32x256xf32>, vector<32x256xf32>, vector<32x256xf32> -> vector<128x256xf32>
    %cst_67 = arith.constant dense<0.000000e+00> : vector<32x256xf32>
    %88 = tpu.matmul %83, %87, %cst_67 {dimension_numbers = #tpu.dot_dimension_numbers<[1], [0], [0], [1], [0, 0, 1, 1], [], []>} : vector<32x128xf32>, vector<128x256xf32>, vector<32x256xf32> -> vector<32x256xf32>
    %cst_68 = arith.constant 0.000000e+00 : f32
    %89 = vector.broadcast %cst_68 : f32 to vector<32x256xf32>
    %90 = arith.maximumf %88, %89 : vector<32x256xf32>
    %c9 = arith.constant 9 : index
    %c0_69 = arith.constant 0 : index
    %c0_70 = arith.constant 0 : index
    %91 = vector.load %arg3[%c9, %c0_69, %c0_70] : memref<10x32x128xf32, #tpu.memory_space<vmem>>, vector<1x32x128xf32>
    %92 = vector.shape_cast %91 : vector<1x32x128xf32> to vector<32x128xf32>
    %c255_i32_71 = arith.constant 255 : i32
    %93 = tpu.dynamic_rotate %90 by %c255_i32_71 dim 1 : vector<32x256xf32>, i32 -> vector<32x256xf32>
    %c240_i32_72 = arith.constant 240 : i32
    %94 = tpu.dynamic_rotate %90 by %c240_i32_72 dim 1 : vector<32x256xf32>, i32 -> vector<32x256xf32>
    %c239_i32_73 = arith.constant 239 : i32
    %95 = tpu.dynamic_rotate %90 by %c239_i32_73 dim 1 : vector<32x256xf32>, i32 -> vector<32x256xf32>
    %96 = tpu.concatenate %90, %93, %94, %95 in 0 : vector<32x256xf32>, vector<32x256xf32>, vector<32x256xf32>, vector<32x256xf32> -> vector<128x256xf32>
    %cst_74 = arith.constant dense<0.000000e+00> : vector<32x256xf32>
    %97 = tpu.matmul %92, %96, %cst_74 {dimension_numbers = #tpu.dot_dimension_numbers<[1], [0], [0], [1], [0, 0, 1, 1], [], []>} : vector<32x128xf32>, vector<128x256xf32>, vector<32x256xf32> -> vector<32x256xf32>
    %cst_75 = arith.constant 0.000000e+00 : f32
    %98 = vector.broadcast %cst_75 : f32 to vector<32x256xf32>
    %99 = arith.maximumf %97, %98 : vector<32x256xf32>
    %c0_76 = arith.constant 0 : index
    %c0_77 = arith.constant 0 : index
    %100 = vector.load %arg4[%c0_76, %c0_77] : memref<1x128xf32, #tpu.memory_space<vmem>>, vector<1x128xf32>
    %c255_i32_78 = arith.constant 255 : i32
    %101 = tpu.dynamic_rotate %99 by %c255_i32_78 dim 1 : vector<32x256xf32>, i32 -> vector<32x256xf32>
    %c240_i32_79 = arith.constant 240 : i32
    %102 = tpu.dynamic_rotate %99 by %c240_i32_79 dim 1 : vector<32x256xf32>, i32 -> vector<32x256xf32>
    %c239_i32_80 = arith.constant 239 : i32
    %103 = tpu.dynamic_rotate %99 by %c239_i32_80 dim 1 : vector<32x256xf32>, i32 -> vector<32x256xf32>
    %104 = tpu.concatenate %99, %101, %102, %103 in 0 : vector<32x256xf32>, vector<32x256xf32>, vector<32x256xf32>, vector<32x256xf32> -> vector<128x256xf32>
    %cst_81 = arith.constant dense<0.000000e+00> : vector<1x256xf32>
    %105 = tpu.matmul %100, %104, %cst_81 {dimension_numbers = #tpu.dot_dimension_numbers<[1], [0], [0], [1], [0, 0, 1, 1], [], []>} : vector<1x128xf32>, vector<128x256xf32>, vector<1x256xf32> -> vector<1x256xf32>
    %c0_82 = arith.constant 0 : index
    %106 = memref.load %arg5[%c0_82] : memref<1xf32, #tpu.memory_space<smem>>
    %107 = vector.broadcast %106 : f32 to vector<1x256xf32>
    %108 = arith.addf %105, %107 : vector<1x256xf32>
    %c0_83 = arith.constant 0 : index
    %c0_84 = arith.constant 0 : index
    %c0_85 = arith.constant 0 : index
    %109 = vector.load %arg6[%c0_83, %c0_84, %c0_85] : memref<1x1x256xf32, #tpu.memory_space<vmem>>, vector<1x1x256xf32>
    %110 = vector.shape_cast %109 : vector<1x1x256xf32> to vector<1x256xf32>
    %111 = vector.shape_cast %108 : vector<1x256xf32> to vector<1x1x256xf32>
    tpu.vector_store %arg6[%c0_83, %c0_84, %c0_85], %111 {strides = array<i32>} : memref<1x1x256xf32, #tpu.memory_space<vmem>>, vector<1x1x256xf32>,
    return
  }
  func.func @transform_0(%arg0: i32) -> (i32, i32, i32) {
    %c0_i32 = arith.constant 0 : i32
    %c0_i32_0 = arith.constant 0 : i32
    %c0_i32_1 = arith.constant 0 : i32
    return %arg0, %c0_i32, %c0_i32_0 : i32, i32, i32
  }
  func.func @transform_1(%arg0: i32) -> (i32, i32) {
    %c0_i32 = arith.constant 0 : i32
    %c0_i32_0 = arith.constant 0 : i32
    %c0_i32_1 = arith.constant 0 : i32
    return %c0_i32, %c0_i32_0 : i32, i32
  }
  func.func @transform_2(%arg0: i32) -> (i32, i32, i32) {
    %c0_i32 = arith.constant 0 : i32
    %c0_i32_0 = arith.constant 0 : i32
    %c0_i32_1 = arith.constant 0 : i32
    %c0_i32_2 = arith.constant 0 : i32
    return %c0_i32, %c0_i32_0, %c0_i32_1 : i32, i32, i32
  }
  func.func @transform_3(%arg0: i32) -> (i32, i32) {
    %c0_i32 = arith.constant 0 : i32
    %c0_i32_0 = arith.constant 0 : i32
    %c0_i32_1 = arith.constant 0 : i32
    return %c0_i32, %c0_i32_0 : i32, i32
  }
  func.func @transform_4(%arg0: i32) -> i32 {
    %c0_i32 = arith.constant 0 : i32
    %c0_i32_0 = arith.constant 0 : i32
    return %c0_i32 : i32
  }
  func.func @transform_5(%arg0: i32) -> (i32, i32, i32) {
    %c0_i32 = arith.constant 0 : i32
    %c0_i32_0 = arith.constant 0 : i32
    %c0_i32_1 = arith.constant 0 : i32
    return %arg0, %c0_i32, %c0_i32_0 : i32, i32, i32
  }
}

</mosaic_0001>

<llo_original>
// kernel: _lambda_.1
$region0: #{_lambda_.1}
  #allocation0 [shape = 'u32[]', space=smem, size = 0x4, offset = 0x4, fixed_abs, tag = 'smem constant byte address 0x4 - core index']
  #allocation1 [shape = 'u32[144,128]{1,0:T(1,128)}', space=vmem, size = 0x12000, scoped, tag = 'internal scratch']
  #allocation2 [shape = 'f32[1]{0:T(128)S(6)}', space=smem, size = 0x200, scoped, tag = 'scoped memory for _lambda_.1']
  %s0 = inlined_call_operand.vmem [shape: f32[2,8,256], index: 0, kind: input, shape index: {}]
  %s1 = inlined_call_operand.vmem [shape: f32[32,32], index: 1, kind: input, shape index: {}]
  %s2 = inlined_call_operand.vmem [shape: f32[10,32,128], index: 2, kind: input, shape index: {}]
  %s3 = inlined_call_operand.vmem [shape: f32[1,128], index: 3, kind: input, shape index: {}]
  %s4 = inlined_call_operand.<no memory space> [shape: f32[1], index: 4, kind: input, shape index: {}]
  %s5 = inlined_call_operand.vmem [shape: f32[2,1,256], index: 5, kind: output, shape index: {}]
  %s6 = sld [smem:[#allocation0]]
  $region53: #{_lambda_.1} parent=0
    _
  %s8 = ssub.s32 1, %s6
  %s9 = scalar_select 0, %s8, %s6
  %10 = sst [smem:[#allocation2]] %s4
  loop: start=0, step=1, limit=4
  $region2: #{_lambda_.1} parent=0 // loop_pre_header
    _
  $region3: #{_lambda_.1} parent=0 // loop_header
    %s12 = sphi 0, %s16
    %p13 = scmp.ge.s32.totalorder %s12, 4
    %s22 = sphi 0, %s24
    %s25 = sphi 0, %s22
    %s26 = sphi 0, %s25
    %s42 = sphi 0, %s26
    %s46 = sphi 0, %s46
    %s48 = sphi 0, %s46
    %s49 = sphi 0, %s48
    %s63 = sphi 0, %s49
    %s67 = sphi 0, %s67
    %s69 = sphi 0, %s67
    %s70 = sphi 0, %s69
    %s84 = sphi 0, %s70
    %s88 = sphi 0, %s88
    %s90 = sphi 0, %s88
    %s91 = sphi 0, %s90
    %s105 = sphi 0, %s91
    %s109 = sphi 0, %s109
    %s111 = sphi 0, %s109
    %s112 = sphi 0, %s111
    %s126 = sphi 0, %s112
    %s132 = sphi 0, %s134
    %s135 = sphi 0, %s132
    %s136 = sphi 0, %s135
    %s152 = sphi 0, %s136
  $region4: #{_lambda_.1} parent=0 // loop_header_branch
    %15 = sbr.rel (%p13) target = $region8
  $region5: #{_lambda_.1} parent=0 // loop_body
    %s17 = ssub.s32 %s12, 1
    %s18 = ssub.s32 %s12, 2
    %s19 = sadd.s32 %s12, 1
    %s20 = ssub.s32 %s12, %s19
    %p21 = scmp.eq.s32.totalorder %s20, 0
    %s23 = sadd.s32 %s22, 1
    %s24 = scalar_select %p21, %s22, %s23
    %p27 = pneg %p21
    %p28 = scmp.eq.s32.totalorder %s12, 1
    %p29 = por %p27, %p28
    %p30 = scmp.ne.s32.totalorder %s22, %s25
    %p31 = scmp.eq.s32.totalorder %s12, 0
    %p32 = por %p30, %p31
    %p33 = scmp.ne.s32.totalorder %s22, %s25
    %p34 = scmp.eq.s32.totalorder %s17, 1
    %p35 = por %p33, %p34
    %p36 = scmp.ne.s32.totalorder %s25, %s26
    %p37 = scmp.eq.s32.totalorder %s17, 0
    %p38 = por %p36, %p37
    %p39 = scmp.ne.s32.totalorder %s25, %s26
    %p40 = scmp.eq.s32.totalorder %s18, 1
    %p41 = por %p39, %p40
    %p43 = scmp.ne.s32.totalorder %s26, %s42
    %p44 = scmp.eq.s32.totalorder %s18, 0
    %p45 = por %p43, %p44
    %s47 = sadd.s32 %s46, 1
    %p50 = scmp.eq.s32.totalorder %s12, 1
    %p51 = scmp.ne.s32.totalorder %s46, %s48
    %p52 = scmp.eq.s32.totalorder %s12, 0
    %p53 = por %p51, %p52
    %p54 = scmp.ne.s32.totalorder %s46, %s48
    %p55 = scmp.eq.s32.totalorder %s17, 1
    %p56 = por %p54, %p55
    %p57 = scmp.ne.s32.totalorder %s48, %s49
    %p58 = scmp.eq.s32.totalorder %s17, 0
    %p59 = por %p57, %p58
    %p60 = scmp.ne.s32.totalorder %s48, %s49
    %p61 = scmp.eq.s32.totalorder %s18, 1
    %p62 = por %p60, %p61
    %p64 = scmp.ne.s32.totalorder %s49, %s63
    %p65 = scmp.eq.s32.totalorder %s18, 0
    %p66 = por %p64, %p65
    %s68 = sadd.s32 %s67, 1
    %p71 = scmp.eq.s32.totalorder %s12, 1
    %p72 = scmp.ne.s32.totalorder %s67, %s69
    %p73 = scmp.eq.s32.totalorder %s12, 0
    %p74 = por %p72, %p73
    %p75 = scmp.ne.s32.totalorder %s67, %s69
    %p76 = scmp.eq.s32.totalorder %s17, 1
    %p77 = por %p75, %p76
    %p78 = scmp.ne.s32.totalorder %s69, %s70
    %p79 = scmp.eq.s32.totalorder %s17, 0
    %p80 = por %p78, %p79
    %p81 = scmp.ne.s32.totalorder %s69, %s70
    %p82 = scmp.eq.s32.totalorder %s18, 1
    %p83 = por %p81, %p82
    %p85 = scmp.ne.s32.totalorder %s70, %s84
    %p86 = scmp.eq.s32.totalorder %s18, 0
    %p87 = por %p85, %p86
    %s89 = sadd.s32 %s88, 1
    %p92 = scmp.eq.s32.totalorder %s12, 1
    %p93 = scmp.ne.s32.totalorder %s88, %s90
    %p94 = scmp.eq.s32.totalorder %s12, 0
    %p95 = por %p93, %p94
    %p96 = scmp.ne.s32.totalorder %s88, %s90
    %p97 = scmp.eq.s32.totalorder %s17, 1
    %p98 = por %p96, %p97
    %p99 = scmp.ne.s32.totalorder %s90, %s91
    %p100 = scmp.eq.s32.totalorder %s17, 0
    %p101 = por %p99, %p100
    %p102 = scmp.ne.s32.totalorder %s90, %s91
    %p103 = scmp.eq.s32.totalorder %s18, 1
    %p104 = por %p102, %p103
    %p106 = scmp.ne.s32.totalorder %s91, %s105
    %p107 = scmp.eq.s32.totalorder %s18, 0
    %p108 = por %p106, %p107
    %s110 = sadd.s32 %s109, 1
    %p113 = scmp.eq.s32.totalorder %s12, 1
    %p114 = scmp.ne.s32.totalorder %s109, %s111
    %p115 = scmp.eq.s32.totalorder %s12, 0
    %p116 = por %p114, %p115
    %p117 = scmp.ne.s32.totalorder %s109, %s111
    %p118 = scmp.eq.s32.totalorder %s17, 1
    %p119 = por %p117, %p118
    %p120 = scmp.ne.s32.totalorder %s111, %s112
    %p121 = scmp.eq.s32.totalorder %s17, 0
    %p122 = por %p120, %p121
    %p123 = scmp.ne.s32.totalorder %s111, %s112
    %p124 = scmp.eq.s32.totalorder %s18, 1
    %p125 = por %p123, %p124
    %p127 = scmp.ne.s32.totalorder %s112, %s126
    %p128 = scmp.eq.s32.totalorder %s18, 0
    %p129 = por %p127, %p128
    %s130 = ssub.s32 %s12, %s19
    %p131 = scmp.eq.s32.totalorder %s130, 0
    %s133 = sadd.s32 %s132, 1
    %s134 = scalar_select %p131, %s132, %s133
    %p137 = pneg %p131
    %p138 = scmp.eq.s32.totalorder %s12, 1
    %p139 = por %p137, %p138
    %p140 = scmp.ne.s32.totalorder %s132, %s135
    %p141 = scmp.eq.s32.totalorder %s12, 0
    %p142 = por %p140, %p141
    %p143 = scmp.ne.s32.totalorder %s132, %s135
    %p144 = scmp.eq.s32.totalorder %s17, 1
    %p145 = por %p143, %p144
    %p146 = scmp.ne.s32.totalorder %s135, %s136
    %p147 = scmp.eq.s32.totalorder %s17, 0
    %p148 = por %p146, %p147
    %p149 = scmp.ne.s32.totalorder %s135, %s136
    %p150 = scmp.eq.s32.totalorder %s18, 1
    %p151 = por %p149, %p150
    %p153 = scmp.ne.s32.totalorder %s136, %s152
    %p154 = scmp.eq.s32.totalorder %s18, 0
    %p155 = por %p153, %p154
    %p156 = scmp.le.s32.totalorder 1, %s12
    %p157 = scmp.lt.s32.totalorder %s12, 3
    %p158 = pnand %p156, %p157
    %p159 = pneg %p158
    // Predicated region
    $region9: #{_lambda_.1} parent=5 // pred_check
      _
    $region10: #{_lambda_.1} parent=5 // pred_check_branch
      %161 = sbr.rel (%p158) target = $region12
    $region11: #{_lambda_.1} parent=5 // pred_region
      %s162 = ssub.s32 %s12, 1
      // Predicated region
      $region13: #{_lambda_.1} parent=11 // pred_check
        %p163 = pneg %p59
      $region14: #{_lambda_.1} parent=11 // pred_check_branch
        %165 = sbr.rel (%p163) target = $region16
      $region15: #{_lambda_.1} parent=11 // pred_region
        _
      $region16: #{_lambda_.1} parent=11 // pred_fallthru
        _
      // Predicated region
      $region17: #{_lambda_.1} parent=11 // pred_check
        %p166 = pneg %p80
      $region18: #{_lambda_.1} parent=11 // pred_check_branch
        %168 = sbr.rel (%p166) target = $region20
      $region19: #{_lambda_.1} parent=11 // pred_region
        _
      $region20: #{_lambda_.1} parent=11 // pred_fallthru
        _
      // Predicated region
      $region21: #{_lambda_.1} parent=11 // pred_check
        %p169 = pneg %p101
      $region22: #{_lambda_.1} parent=11 // pred_check_branch
        %171 = sbr.rel (%p169) target = $region24
      $region23: #{_lambda_.1} parent=11 // pred_region
        _
      $region24: #{_lambda_.1} parent=11 // pred_fallthru
        _
      // Predicated region
      $region25: #{_lambda_.1} parent=11 // pred_check
        %p172 = pneg %p122
      $region26: #{_lambda_.1} parent=11 // pred_check_branch
        %174 = sbr.rel (%p172) target = $region28
      $region27: #{_lambda_.1} parent=11 // pred_region
        _
      $region28: #{_lambda_.1} parent=11 // pred_fallthru
        _
    $region12: #{_lambda_.1} parent=5 // pred_fallthru
      _
    %p175 = scmp.lt.s32.totalorder %s12, 2
    // Predicated region
    $region29: #{_lambda_.1} parent=5 // pred_check
      %p176 = pneg %p175
    $region30: #{_lambda_.1} parent=5 // pred_check_branch
      %178 = sbr.rel (%p176) target = $region32
    $region31: #{_lambda_.1} parent=5 // pred_region
      // Predicated region
      $region33: #{_lambda_.1} parent=31 // pred_check
        %p179 = pneg %p32
      $region34: #{_lambda_.1} parent=31 // pred_check_branch
        %181 = sbr.rel (%p179) target = $region36
      $region35: #{_lambda_.1} parent=31 // pred_region
        %p182 = scmp.lt.s32.totalorder %s12, 1
        %s183 = scalar_select %p182, %s12, 1
        %s184 = smul.addr %s183, 2
        %s185 = smul.addr %s184, 8
        %s186 = scalar_lea.vmem %s0, %s185
      $region36: #{_lambda_.1} parent=31 // pred_fallthru
        _
    $region32: #{_lambda_.1} parent=5 // pred_fallthru
      _
    %p187 = scmp.le.s32.totalorder 1, %s12
    %p188 = scmp.lt.s32.totalorder %s12, 3
    %p189 = pnand %p187, %p188
    %p190 = pneg %p189
    // Predicated region
    $region37: #{_lambda_.1} parent=5 // pred_check
      _
    $region38: #{_lambda_.1} parent=5 // pred_check_branch
      %192 = sbr.rel (%p189) target = $region40
    $region39: #{_lambda_.1} parent=5 // pred_region
      %s193 = ssub.s32 %s12, 1
      %p194 = scmp.lt.s32.totalorder %s17, 1
      %s195 = scalar_select %p194, %s17, 1
      %s196 = smul.addr %s195, 2
      %s197 = smul.addr %s196, 8
      %s198 = scalar_lea.vmem %s0, %s197
      %p199 = pneg %p38
      %p200 = pneg %p35
      %p201 = pneg %p59
      %p202 = pneg %p56
      %p203 = pneg %p80
      %p204 = pneg %p77
      %p205 = pneg %p101
      %p206 = pneg %p98
      %p207 = pneg %p122
      %p208 = pneg %p119
      %p209 = pneg %p148
      %p210 = pneg %p145
      %p211 = scmp.lt.s32.totalorder %s17, 1
      %s212 = scalar_select %p211, %s17, 1
      %s213 = smul.addr %s212, 2
      %s214 = scalar_lea.vmem %s5, %s213
      %p215 = scmp.lt.s32.totalorder %s17, 1
      %s216 = scalar_select %p215, %s17, 1
      %s217 = smul.addr %s216, 2
      %s218 = smul.addr %s217, 8
      %s219 = scalar_lea.vmem %s0, %s218
      %p220 = scmp.lt.s32.totalorder %s17, 1
      %s221 = scalar_select %p220, %s17, 1
      %s222 = smul.addr %s221, 2
      %s223 = scalar_lea.vmem %s5, %s222
      %v224 = vld [vmem:[%s219] sm:$0xff]
      %v225 = vld [vmem:[%s219 + $0x8] sm:$0xff]
      %v226 = vld [vmem:[%s1] sm:$0xff]
      %v227 = vld [vmem:[%s1 + $0x8] sm:$0xff]
      %v228 = vld [vmem:[%s1 + $0x10] sm:$0xff]
      %v229 = vld [vmem:[%s1 + $0x18] sm:$0xff]
      %230 = vrot.lane.b32.xlu0 %v224, 127
      %v231 = vpop.permute.xlu0 %230
      %232 = vrot.lane.b32.xlu0 %v225, 127
      %v233 = vpop.permute.xlu0 %232
      %v234 = vlaneseq
      %v235 = vand.u32 %v234, 127
      %vm236 = vcmp.lt.s32.totalorder %v235, 127
      %v237 = vsel %vm236, %v231, %v233
      %v238 = vsel %vm236, %v233, %v231
      %239 = vrot.lane.b32.xlu0 %v224, 112
      %v240 = vpop.permute.xlu0 %239
      %241 = vrot.lane.b32.xlu0 %v225, 112
      %v242 = vpop.permute.xlu0 %241
      %vm243 = vcmp.lt.s32.totalorder %v235, 112
      %v244 = vsel %vm243, %v240, %v242
      %v245 = vsel %vm243, %v242, %v240
      %246 = vrot.lane.b32.xlu0 %v224, 111
      %v247 = vpop.permute.xlu0 %246
      %248 = vrot.lane.b32.xlu0 %v225, 111
      %v249 = vpop.permute.xlu0 %248
      %vm250 = vcmp.lt.s32.totalorder %v235, 111
      %v251 = vsel %vm250, %v247, %v249
      %v252 = vsel %vm250, %v249, %v247
      %vm253 = vcmask 261120
      %v255 = vsel %vm253, %v226, 0
      %v258 = vsel %vm253, %v227, 0
      %v261 = vsel %vm253, %v228, 0
      %v264 = vsel %vm253, %v229, 0
      %266 = vmatprep.subr.mxu0 %v225
      %267 = vmatpush1.msra.mxu0 %v224
      %268 = vmatprep.subr.mxu0 %v238
      %269 = vmatpush1.msra.mxu0 %v237
      %270 = vmatprep.subr.mxu0 %v245
      %271 = vmatpush1.msra.mxu0 %v244
      %272 = vmatprep.subr.mxu0 %v252
      %273 = vmatpush1.msra.mxu0 %v251
      %274 = vmatprep.subr.mxu0 0.0
      %275 = vmatpush1.msra.mxu0 0.0
      %276 = vmatprep.subr.mxu0 0.0
      %277 = vmatpush1.msra.mxu0 0.0
      %278 = vmatprep.subr.mxu0 0.0
      %279 = vmatpush1.msra.mxu0 0.0
      %280 = vmatprep.subr.mxu0 0.0
      %281 = vmatpush1.msra.mxu0 0.0
      %282 = vmatprep.subr.mxu0 0.0
      %283 = vmatpush1.msra.mxu0 0.0
      %284 = vmatprep.subr.mxu0 0.0
      %285 = vmatpush1.msra.mxu0 0.0
      %286 = vmatprep.subr.mxu0 0.0
      %287 = vmatpush1.msra.mxu0 0.0
      %288 = vmatprep.subr.mxu0 0.0
      %289 = vmatpush1.msra.mxu0 0.0
      %290 = vmatprep.subr.mxu0 0.0
      %291 = vmatpush1.msra.mxu0 0.0
      %292 = vmatprep.subr.mxu0 0.0
      %293 = vmatpush1.msra.mxu0 0.0
      %294 = vmatprep.subr.mxu0 0.0
      %295 = vmatpush1.msra.mxu0 0.0
      %296 = vmatprep.subr.mxu0 0.0
      %297 = vmatpush1.msra.mxu0 0.0
      %298 = vmatprep.subr.mxu0 0.0
      %299 = vmatpush1.msra.mxu0 0.0
      %300 = vmatprep.subr.mxu0 0.0
      %301 = vmatpush1.msra.mxu0 0.0
      %302 = vmatprep.subr.mxu0 0.0
      %303 = vmatpush1.msra.mxu0 0.0
      %304 = vmatprep.subr.mxu0 0.0
      %305 = vmatpush1.msra.mxu0 0.0
      %306 = vmatprep.subr.mxu0 0.0
      %307 = vmatpush1.msra.mxu0 0.0
      %308 = vmatprep.subr.mxu0 0.0
      %309 = vmatpush1.msra.mxu0 0.0
      %310 = vmatprep.subr.mxu0 0.0
      %311 = vmatpush1.msra.mxu0 0.0
      %312 = vmatprep.subr.mxu0 0.0
      %313 = vmatpush1.msra.mxu0 0.0
      %314 = vmatprep.subr.mxu0 0.0
      %315 = vmatpush1.msra.mxu0 0.0
      %316 = vmatprep.subr.mxu0 0.0
      %317 = vmatpush1.msra.mxu0 0.0
      %318 = vmatprep.subr.mxu0 0.0
      %319 = vmatpush1.msra.mxu0 0.0
      %320 = vmatprep.subr.mxu0 0.0
      %321 = vmatpush1.msra.mxu0 0.0
      %322 = vmatprep.subr.mxu0 0.0
      %323 = vmatpush1.msra.mxu0 0.0
      %324 = vmatprep.subr.mxu0 0.0
      %325 = vmatpush1.msra.mxu0 0.0
      %326 = vmatprep.subr.mxu0 0.0
      %327 = vmatpush1.msra.mxu0 0.0
      %328 = vmatprep.subr.mxu0 0.0
      %329 = vmatpush1.msra.mxu0 0.0
      %330 = vmatprep.mubr.f32.mxu0 0.0
      %331 = vmatmul.mubr.f32.gmra.mrb[0].mxu0 %v255
      %v332 = vpop.f32.mrb[0].mxu0
      %v333 = vadd.f32 0.0, %v332
      %v334 = vpop.f32.mrb[0].mxu0
      %v335 = vadd.f32 0.0, %v334
      %336 = vmatprep.mubr.f32.mxu0 0.0
      %337 = vmatmul.mubr.f32.gmra.mrb[0].mxu0 %v258
      %v338 = vpop.f32.mrb[0].mxu0
      %v339 = vadd.f32 0.0, %v338
      %v340 = vpop.f32.mrb[0].mxu0
      %v341 = vadd.f32 0.0, %v340
      %342 = vmatprep.mubr.f32.mxu0 0.0
      %343 = vmatmul.mubr.f32.gmra.mrb[0].mxu0 %v261
      %v344 = vpop.f32.mrb[0].mxu0
      %v345 = vadd.f32 0.0, %v344
      %v346 = vpop.f32.mrb[0].mxu0
      %v347 = vadd.f32 0.0, %v346
      %348 = vmatprep.mubr.f32.mxu0 0.0
      %349 = vmatmul.mubr.f32.gmra.mrb[0].mxu0 %v264
      %v350 = vpop.f32.mrb[0].mxu0
      %v351 = vadd.f32 0.0, %v350
      %v352 = vpop.f32.mrb[0].mxu0
      %v353 = vadd.f32 0.0, %v352
      %354 = vdwg.mxu0
      %v355 = vmax.f32 %v333, 0.0
      %v356 = vmax.f32 %v335, 0.0
      %v357 = vmax.f32 %v339, 0.0
      %v358 = vmax.f32 %v341, 0.0
      %v359 = vmax.f32 %v345, 0.0
      %v360 = vmax.f32 %v347, 0.0
      %v361 = vmax.f32 %v351, 0.0
      %v362 = vmax.f32 %v353, 0.0
      %v363 = vld [vmem:[%s2] sm:$0xff]
      %v364 = vld [vmem:[%s2 + $0x8] sm:$0xff]
      %v365 = vld [vmem:[%s2 + $0x10] sm:$0xff]
      %v366 = vld [vmem:[%s2 + $0x18] sm:$0xff]
      %367 = vrot.lane.b32.xlu0 %v355, 127
      %v368 = vpop.permute.xlu0 %367
      %369 = vrot.lane.b32.xlu0 %v357, 127
      %v370 = vpop.permute.xlu0 %369
      %371 = vrot.lane.b32.xlu0 %v359, 127
      %v372 = vpop.permute.xlu0 %371
      %373 = vrot.lane.b32.xlu0 %v361, 127
      %v374 = vpop.permute.xlu0 %373
      %375 = vrot.lane.b32.xlu0 %v356, 127
      %v376 = vpop.permute.xlu0 %375
      %377 = vrot.lane.b32.xlu0 %v358, 127
      %v378 = vpop.permute.xlu0 %377
      %379 = vrot.lane.b32.xlu0 %v360, 127
      %v380 = vpop.permute.xlu0 %379
      %381 = vrot.lane.b32.xlu0 %v362, 127
      %v382 = vpop.permute.xlu0 %381
      %v383 = vsel %vm236, %v368, %v376
      %v384 = vsel %vm236, %v370, %v378
      %v385 = vsel %vm236, %v372, %v380
      %v386 = vsel %vm236, %v374, %v382
      %v387 = vsel %vm236, %v376, %v368
      %v388 = vsel %vm236, %v378, %v370
      %v389 = vsel %vm236, %v380, %v372
      %v390 = vsel %vm236, %v382, %v374
      %391 = vrot.lane.b32.xlu0 %v355, 112
      %v392 = vpop.permute.xlu0 %391
      %393 = vrot.lane.b32.xlu0 %v357, 112
      %v394 = vpop.permute.xlu0 %393
      %395 = vrot.lane.b32.xlu0 %v359, 112
      %v396 = vpop.permute.xlu0 %395
      %397 = vrot.lane.b32.xlu0 %v361, 112
      %v398 = vpop.permute.xlu0 %397
      %399 = vrot.lane.b32.xlu0 %v356, 112
      %v400 = vpop.permute.xlu0 %399
      %401 = vrot.lane.b32.xlu0 %v358, 112
      %v402 = vpop.permute.xlu0 %401
      %403 = vrot.lane.b32.xlu0 %v360, 112
      %v404 = vpop.permute.xlu0 %403
      %405 = vrot.lane.b32.xlu0 %v362, 112
      %v406 = vpop.permute.xlu0 %405
      %v407 = vsel %vm243, %v392, %v400
      %v408 = vsel %vm243, %v394, %v402
      %v409 = vsel %vm243, %v396, %v404
      %v410 = vsel %vm243, %v398, %v406
      %v411 = vsel %vm243, %v400, %v392
      %v412 = vsel %vm243, %v402, %v394
      %v413 = vsel %vm243, %v404, %v396
      %v414 = vsel %vm243, %v406, %v398
      %415 = vrot.lane.b32.xlu0 %v355, 111
      %v416 = vpop.permute.xlu0 %415
      %417 = vrot.lane.b32.xlu0 %v357, 111
      %v418 = vpop.permute.xlu0 %417
      %419 = vrot.lane.b32.xlu0 %v359, 111
      %v420 = vpop.permute.xlu0 %419
      %421 = vrot.lane.b32.xlu0 %v361, 111
      %v422 = vpop.permute.xlu0 %421
      %423 = vrot.lane.b32.xlu0 %v356, 111
      %v424 = vpop.permute.xlu0 %423
      %425 = vrot.lane.b32.xlu0 %v358, 111
      %v426 = vpop.permute.xlu0 %425
      %427 = vrot.lane.b32.xlu0 %v360, 111
      %v428 = vpop.permute.xlu0 %427
      %429 = vrot.lane.b32.xlu0 %v362, 111
      %v430 = vpop.permute.xlu0 %429
      %v431 = vsel %vm250, %v416, %v424
      %v432 = vsel %vm250, %v418, %v426
      %v433 = vsel %vm250, %v420, %v428
      %v434 = vsel %vm250, %v422, %v430
      %v435 = vsel %vm250, %v424, %v416
      %v436 = vsel %vm250, %v426, %v418
      %v437 = vsel %vm250, %v428, %v420
      %v438 = vsel %vm250, %v430, %v422
      %439 = vmatprep.subr.mxu0 %v356
      %440 = vmatpush1.msra.mxu0 %v355
      %441 = vmatprep.subr.mxu0 %v358
      %442 = vmatpush1.msra.mxu0 %v357
      %443 = vmatprep.subr.mxu0 %v360
      %444 = vmatpush1.msra.mxu0 %v359
      %445 = vmatprep.subr.mxu0 %v362
      %446 = vmatpush1.msra.mxu0 %v361
      %447 = vmatprep.subr.mxu0 %v387
      %448 = vmatpush1.msra.mxu0 %v383
      %449 = vmatprep.subr.mxu0 %v388
      %450 = vmatpush1.msra.mxu0 %v384
      %451 = vmatprep.subr.mxu0 %v389
      %452 = vmatpush1.msra.mxu0 %v385
      %453 = vmatprep.subr.mxu0 %v390
      %454 = vmatpush1.msra.mxu0 %v386
      %455 = vmatprep.subr.mxu0 %v411
      %456 = vmatpush1.msra.mxu0 %v407
      %457 = vmatprep.subr.mxu0 %v412
      %458 = vmatpush1.msra.mxu0 %v408
      %459 = vmatprep.subr.mxu0 %v413
      %460 = vmatpush1.msra.mxu0 %v409
      %461 = vmatprep.subr.mxu0 %v414
      %462 = vmatpush1.msra.mxu0 %v410
      %463 = vmatprep.subr.mxu0 %v435
      %464 = vmatpush1.msra.mxu0 %v431
      %465 = vmatprep.subr.mxu0 %v436
      %466 = vmatpush1.msra.mxu0 %v432
      %467 = vmatprep.subr.mxu0 %v437
      %468 = vmatpush1.msra.mxu0 %v433
      %469 = vmatprep.subr.mxu0 %v438
      %470 = vmatpush1.msra.mxu0 %v434
      %471 = vmatprep.subr.mxu0 0.0
      %472 = vmatpush1.msra.mxu0 0.0
      %473 = vmatprep.subr.mxu0 0.0
      %474 = vmatpush1.msra.mxu0 0.0
      %475 = vmatprep.subr.mxu0 0.0
      %476 = vmatpush1.msra.mxu0 0.0
      %477 = vmatprep.subr.mxu0 0.0
      %478 = vmatpush1.msra.mxu0 0.0
      %479 = vmatprep.subr.mxu0 0.0
      %480 = vmatpush1.msra.mxu0 0.0
      %481 = vmatprep.subr.mxu0 0.0
      %482 = vmatpush1.msra.mxu0 0.0
      %483 = vmatprep.subr.mxu0 0.0
      %484 = vmatpush1.msra.mxu0 0.0
      %485 = vmatprep.subr.mxu0 0.0
      %486 = vmatpush1.msra.mxu0 0.0
      %487 = vmatprep.subr.mxu0 0.0
      %488 = vmatpush1.msra.mxu0 0.0
      %489 = vmatprep.subr.mxu0 0.0
      %490 = vmatpush1.msra.mxu0 0.0
      %491 = vmatprep.subr.mxu0 0.0
      %492 = vmatpush1.msra.mxu0 0.0
      %493 = vmatprep.subr.mxu0 0.0
      %494 = vmatpush1.msra.mxu0 0.0
      %495 = vmatprep.subr.mxu0 0.0
      %496 = vmatpush1.msra.mxu0 0.0
      %497 = vmatprep.subr.mxu0 0.0
      %498 = vmatpush1.msra.mxu0 0.0
      %499 = vmatprep.subr.mxu0 0.0
      %500 = vmatpush1.msra.mxu0 0.0
      %501 = vmatprep.subr.mxu0 0.0
      %502 = vmatpush1.msra.mxu0 0.0
      %503 = vmatprep.mubr.f32.mxu0 0.0
      %504 = vmatmul.mubr.f32.gmra.mrb[0].mxu0 %v363
      %v505 = vpop.f32.mrb[0].mxu0
      %v506 = vadd.f32 0.0, %v505
      %v507 = vpop.f32.mrb[0].mxu0
      %v508 = vadd.f32 0.0, %v507
      %509 = vmatprep.mubr.f32.mxu0 0.0
      %510 = vmatmul.mubr.f32.gmra.mrb[0].mxu0 %v364
      %v511 = vpop.f32.mrb[0].mxu0
      %v512 = vadd.f32 0.0, %v511
      %v513 = vpop.f32.mrb[0].mxu0
      %v514 = vadd.f32 0.0, %v513
      %515 = vmatprep.mubr.f32.mxu0 0.0
      %516 = vmatmul.mubr.f32.gmra.mrb[0].mxu0 %v365
      %v517 = vpop.f32.mrb[0].mxu0
      %v518 = vadd.f32 0.0, %v517
      %v519 = vpop.f32.mrb[0].mxu0
      %v520 = vadd.f32 0.0, %v519
      %521 = vmatprep.mubr.f32.mxu0 0.0
      %522 = vmatmul.mubr.f32.gmra.mrb[0].mxu0 %v366
      %v523 = vpop.f32.mrb[0].mxu0
      %v524 = vadd.f32 0.0, %v523
      %v525 = vpop.f32.mrb[0].mxu0
      %v526 = vadd.f32 0.0, %v525
      %527 = vdwg.mxu0
      %v528 = vmax.f32 %v506, 0.0
      %v529 = vmax.f32 %v508, 0.0
      %v530 = vmax.f32 %v512, 0.0
      %v531 = vmax.f32 %v514, 0.0
      %v532 = vmax.f32 %v518, 0.0
      %v533 = vmax.f32 %v520, 0.0
      %v534 = vmax.f32 %v524, 0.0
      %v535 = vmax.f32 %v526, 0.0
      %s536 = scalar_lea.vmem %s2, 32
      %v537 = vld [vmem:[%s536] sm:$0xff]
      %v538 = vld [vmem:[%s536 + $0x8] sm:$0xff]
      %v539 = vld [vmem:[%s536 + $0x10] sm:$0xff]
      %v540 = vld [vmem:[%s536 + $0x18] sm:$0xff]
      %541 = vrot.lane.b32.xlu0 %v528, 127
      %v542 = vpop.permute.xlu0 %541
      %543 = vrot.lane.b32.xlu0 %v530, 127
      %v544 = vpop.permute.xlu0 %543
      %545 = vrot.lane.b32.xlu0 %v532, 127
      %v546 = vpop.permute.xlu0 %545
      %547 = vrot.lane.b32.xlu0 %v534, 127
      %v548 = vpop.permute.xlu0 %547
      %549 = vrot.lane.b32.xlu0 %v529, 127
      %v550 = vpop.permute.xlu0 %549
      %551 = vrot.lane.b32.xlu0 %v531, 127
      %v552 = vpop.permute.xlu0 %551
      %553 = vrot.lane.b32.xlu0 %v533, 127
      %v554 = vpop.permute.xlu0 %553
      %555 = vrot.lane.b32.xlu0 %v535, 127
      %v556 = vpop.permute.xlu0 %555
      %v557 = vsel %vm236, %v542, %v550
      %v558 = vsel %vm236, %v544, %v552
      %v559 = vsel %vm236, %v546, %v554
      %v560 = vsel %vm236, %v548, %v556
      %v561 = vsel %vm236, %v550, %v542
      %v562 = vsel %vm236, %v552, %v544
      %v563 = vsel %vm236, %v554, %v546
      %v564 = vsel %vm236, %v556, %v548
      %565 = vrot.lane.b32.xlu0 %v528, 112
      %v566 = vpop.permute.xlu0 %565
      %567 = vrot.lane.b32.xlu0 %v530, 112
      %v568 = vpop.permute.xlu0 %567
      %569 = vrot.lane.b32.xlu0 %v532, 112
      %v570 = vpop.permute.xlu0 %569
      %571 = vrot.lane.b32.xlu0 %v534, 112
      %v572 = vpop.permute.xlu0 %571
      %573 = vrot.lane.b32.xlu0 %v529, 112
      %v574 = vpop.permute.xlu0 %573
      %575 = vrot.lane.b32.xlu0 %v531, 112
      %v576 = vpop.permute.xlu0 %575
      %577 = vrot.lane.b32.xlu0 %v533, 112
      %v578 = vpop.permute.xlu0 %577
      %579 = vrot.lane.b32.xlu0 %v535, 112
      %v580 = vpop.permute.xlu0 %579
      %v581 = vsel %vm243, %v566, %v574
      %v582 = vsel %vm243, %v568, %v576
      %v583 = vsel %vm243, %v570, %v578
      %v584 = vsel %vm243, %v572, %v580
      %v585 = vsel %vm243, %v574, %v566
      %v586 = vsel %vm243, %v576, %v568
      %v587 = vsel %vm243, %v578, %v570
      %v588 = vsel %vm243, %v580, %v572
      %589 = vrot.lane.b32.xlu0 %v528, 111
      %v590 = vpop.permute.xlu0 %589
      %591 = vrot.lane.b32.xlu0 %v530, 111
      %v592 = vpop.permute.xlu0 %591
      %593 = vrot.lane.b32.xlu0 %v532, 111
      %v594 = vpop.permute.xlu0 %593
      %595 = vrot.lane.b32.xlu0 %v534, 111
      %v596 = vpop.permute.xlu0 %595
      %597 = vrot.lane.b32.xlu0 %v529, 111
      %v598 = vpop.permute.xlu0 %597
      %599 = vrot.lane.b32.xlu0 %v531, 111
      %v600 = vpop.permute.xlu0 %599
      %601 = vrot.lane.b32.xlu0 %v533, 111
      %v602 = vpop.permute.xlu0 %601
      %603 = vrot.lane.b32.xlu0 %v535, 111
      %v604 = vpop.permute.xlu0 %603
      %v605 = vsel %vm250, %v590, %v598
      %v606 = vsel %vm250, %v592, %v600
      %v607 = vsel %vm250, %v594, %v602
      %v608 = vsel %vm250, %v596, %v604
      %v609 = vsel %vm250, %v598, %v590
      %v610 = vsel %vm250, %v600, %v592
      %v611 = vsel %vm250, %v602, %v594
      %v612 = vsel %vm250, %v604, %v596
      %613 = vmatprep.subr.mxu0 %v529
      %614 = vmatpush1.msra.mxu0 %v528
      %615 = vmatprep.subr.mxu0 %v531
      %616 = vmatpush1.msra.mxu0 %v530
      %617 = vmatprep.subr.mxu0 %v533
      %618 = vmatpush1.msra.mxu0 %v532
      %619 = vmatprep.subr.mxu0 %v535
      %620 = vmatpush1.msra.mxu0 %v534
      %621 = vmatprep.subr.mxu0 %v561
      %622 = vmatpush1.msra.mxu0 %v557
      %623 = vmatprep.subr.mxu0 %v562
      %624 = vmatpush1.msra.mxu0 %v558
      %625 = vmatprep.subr.mxu0 %v563
      %626 = vmatpush1.msra.mxu0 %v559
      %627 = vmatprep.subr.mxu0 %v564
      %628 = vmatpush1.msra.mxu0 %v560
      %629 = vmatprep.subr.mxu0 %v585
      %630 = vmatpush1.msra.mxu0 %v581
      %631 = vmatprep.subr.mxu0 %v586
      %632 = vmatpush1.msra.mxu0 %v582
      %633 = vmatprep.subr.mxu0 %v587
      %634 = vmatpush1.msra.mxu0 %v583
      %635 = vmatprep.subr.mxu0 %v588
      %636 = vmatpush1.msra.mxu0 %v584
      %637 = vmatprep.subr.mxu0 %v609
      %638 = vmatpush1.msra.mxu0 %v605
      %639 = vmatprep.subr.mxu0 %v610
      %640 = vmatpush1.msra.mxu0 %v606
      %641 = vmatprep.subr.mxu0 %v611
      %642 = vmatpush1.msra.mxu0 %v607
      %643 = vmatprep.subr.mxu0 %v612
      %644 = vmatpush1.msra.mxu0 %v608
      %645 = vmatprep.subr.mxu0 0.0
      %646 = vmatpush1.msra.mxu0 0.0
      %647 = vmatprep.subr.mxu0 0.0
      %648 = vmatpush1.msra.mxu0 0.0
      %649 = vmatprep.subr.mxu0 0.0
      %650 = vmatpush1.msra.mxu0 0.0
      %651 = vmatprep.subr.mxu0 0.0
      %652 = vmatpush1.msra.mxu0 0.0
      %653 = vmatprep.subr.mxu0 0.0
      %654 = vmatpush1.msra.mxu0 0.0
      %655 = vmatprep.subr.mxu0 0.0
      %656 = vmatpush1.msra.mxu0 0.0
      %657 = vmatprep.subr.mxu0 0.0
      %658 = vmatpush1.msra.mxu0 0.0
      %659 = vmatprep.subr.mxu0 0.0
      %660 = vmatpush1.msra.mxu0 0.0
      %661 = vmatprep.subr.mxu0 0.0
      %662 = vmatpush1.msra.mxu0 0.0
      %663 = vmatprep.subr.mxu0 0.0
      %664 = vmatpush1.msra.mxu0 0.0
      %665 = vmatprep.subr.mxu0 0.0
      %666 = vmatpush1.msra.mxu0 0.0
      %667 = vmatprep.subr.mxu0 0.0
      %668 = vmatpush1.msra.mxu0 0.0
      %669 = vmatprep.subr.mxu0 0.0
      %670 = vmatpush1.msra.mxu0 0.0
      %671 = vmatprep.subr.mxu0 0.0
      %672 = vmatpush1.msra.mxu0 0.0
      %673 = vmatprep.subr.mxu0 0.0
      %674 = vmatpush1.msra.mxu0 0.0
      %675 = vmatprep.subr.mxu0 0.0
      %676 = vmatpush1.msra.mxu0 0.0
      %677 = vmatprep.mubr.f32.mxu0 0.0
      %678 = vmatmul.mubr.f32.gmra.mrb[0].mxu0 %v537
      %v679 = vpop.f32.mrb[0].mxu0
      %v680 = vadd.f32 0.0, %v679
      %v681 = vpop.f32.mrb[0].mxu0
      %v682 = vadd.f32 0.0, %v681
      %683 = vmatprep.mubr.f32.mxu0 0.0
      %684 = vmatmul.mubr.f32.gmra.mrb[0].mxu0 %v538
      %v685 = vpop.f32.mrb[0].mxu0
      %v686 = vadd.f32 0.0, %v685
      %v687 = vpop.f32.mrb[0].mxu0
      %v688 = vadd.f32 0.0, %v687
      %689 = vmatprep.mubr.f32.mxu0 0.0
      %690 = vmatmul.mubr.f32.gmra.mrb[0].mxu0 %v539
      %v691 = vpop.f32.mrb[0].mxu0
      %v692 = vadd.f32 0.0, %v691
      %v693 = vpop.f32.mrb[0].mxu0
      %v694 = vadd.f32 0.0, %v693
      %695 = vmatprep.mubr.f32.mxu0 0.0
      %696 = vmatmul.mubr.f32.gmra.mrb[0].mxu0 %v540
      %v697 = vpop.f32.mrb[0].mxu0
      %v698 = vadd.f32 0.0, %v697
      %v699 = vpop.f32.mrb[0].mxu0
      %v700 = vadd.f32 0.0, %v699
      %701 = vdwg.mxu0
      %v702 = vmax.f32 %v680, 0.0
      %v703 = vmax.f32 %v682, 0.0
      %v704 = vmax.f32 %v686, 0.0
      %v705 = vmax.f32 %v688, 0.0
      %v706 = vmax.f32 %v692, 0.0
      %v707 = vmax.f32 %v694, 0.0
      %v708 = vmax.f32 %v698, 0.0
      %v709 = vmax.f32 %v700, 0.0
      %s710 = scalar_lea.vmem %s2, 64
      %v711 = vld [vmem:[%s710] sm:$0xff]
      %v712 = vld [vmem:[%s710 + $0x8] sm:$0xff]
      %v713 = vld [vmem:[%s710 + $0x10] sm:$0xff]
      %v714 = vld [vmem:[%s710 + $0x18] sm:$0xff]
      %715 = vrot.lane.b32.xlu0 %v702, 127
      %v716 = vpop.permute.xlu0 %715
      %717 = vrot.lane.b32.xlu0 %v704, 127
      %v718 = vpop.permute.xlu0 %717
      %719 = vrot.lane.b32.xlu0 %v706, 127
      %v720 = vpop.permute.xlu0 %719
      %721 = vrot.lane.b32.xlu0 %v708, 127
      %v722 = vpop.permute.xlu0 %721
      %723 = vrot.lane.b32.xlu0 %v703, 127
      %v724 = vpop.permute.xlu0 %723
      %725 = vrot.lane.b32.xlu0 %v705, 127
      %v726 = vpop.permute.xlu0 %725
      %727 = vrot.lane.b32.xlu0 %v707, 127
      %v728 = vpop.permute.xlu0 %727
      %729 = vrot.lane.b32.xlu0 %v709, 127
      %v730 = vpop.permute.xlu0 %729
      %v731 = vsel %vm236, %v716, %v724
      %v732 = vsel %vm236, %v718, %v726
      %v733 = vsel %vm236, %v720, %v728
      %v734 = vsel %vm236, %v722, %v730
      %v735 = vsel %vm236, %v724, %v716
      %v736 = vsel %vm236, %v726, %v718
      %v737 = vsel %vm236, %v728, %v720
      %v738 = vsel %vm236, %v730, %v722
      %739 = vrot.lane.b32.xlu0 %v702, 112
      %v740 = vpop.permute.xlu0 %739
      %741 = vrot.lane.b32.xlu0 %v704, 112
      %v742 = vpop.permute.xlu0 %741
      %743 = vrot.lane.b32.xlu0 %v706, 112
      %v744 = vpop.permute.xlu0 %743
      %745 = vrot.lane.b32.xlu0 %v708, 112
      %v746 = vpop.permute.xlu0 %745
      %747 = vrot.lane.b32.xlu0 %v703, 112
      %v748 = vpop.permute.xlu0 %747
      %749 = vrot.lane.b32.xlu0 %v705, 112
      %v750 = vpop.permute.xlu0 %749
      %751 = vrot.lane.b32.xlu0 %v707, 112
      %v752 = vpop.permute.xlu0 %751
      %753 = vrot.lane.b32.xlu0 %v709, 112
      %v754 = vpop.permute.xlu0 %753
      %v755 = vsel %vm243, %v740, %v748
      %v756 = vsel %vm243, %v742, %v750
      %v757 = vsel %vm243, %v744, %v752
      %v758 = vsel %vm243, %v746, %v754
      %v759 = vsel %vm243, %v748, %v740
      %v760 = vsel %vm243, %v750, %v742
      %v761 = vsel %vm243, %v752, %v744
      %v762 = vsel %vm243, %v754, %v746
      %763 = vrot.lane.b32.xlu0 %v702, 111
      %v764 = vpop.permute.xlu0 %763
      %765 = vrot.lane.b32.xlu0 %v704, 111
      %v766 = vpop.permute.xlu0 %765
      %767 = vrot.lane.b32.xlu0 %v706, 111
      %v768 = vpop.permute.xlu0 %767
      %769 = vrot.lane.b32.xlu0 %v708, 111
      %v770 = vpop.permute.xlu0 %769
      %771 = vrot.lane.b32.xlu0 %v703, 111
      %v772 = vpop.permute.xlu0 %771
      %773 = vrot.lane.b32.xlu0 %v705, 111
      %v774 = vpop.permute.xlu0 %773
      %775 = vrot.lane.b32.xlu0 %v707, 111
      %v776 = vpop.permute.xlu0 %775
      %777 = vrot.lane.b32.xlu0 %v709, 111
      %v778 = vpop.permute.xlu0 %777
      %v779 = vsel %vm250, %v764, %v772
      %v780 = vsel %vm250, %v766, %v774
      %v781 = vsel %vm250, %v768, %v776
      %v782 = vsel %vm250, %v770, %v778
      %v783 = vsel %vm250, %v772, %v764
      %v784 = vsel %vm250, %v774, %v766
      %v785 = vsel %vm250, %v776, %v768
      %v786 = vsel %vm250, %v778, %v770
      %787 = vmatprep.subr.mxu0 %v703
      %788 = vmatpush1.msra.mxu0 %v702
      %789 = vmatprep.subr.mxu0 %v705
      %790 = vmatpush1.msra.mxu0 %v704
      %791 = vmatprep.subr.mxu0 %v707
      %792 = vmatpush1.msra.mxu0 %v706
      %793 = vmatprep.subr.mxu0 %v709
      %794 = vmatpush1.msra.mxu0 %v708
      %795 = vmatprep.subr.mxu0 %v735
      %796 = vmatpush1.msra.mxu0 %v731
      %797 = vmatprep.subr.mxu0 %v736
      %798 = vmatpush1.msra.mxu0 %v732
      %799 = vmatprep.subr.mxu0 %v737
      %800 = vmatpush1.msra.mxu0 %v733
      %801 = vmatprep.subr.mxu0 %v738
      %802 = vmatpush1.msra.mxu0 %v734
      %803 = vmatprep.subr.mxu0 %v759
      %804 = vmatpush1.msra.mxu0 %v755
      %805 = vmatprep.subr.mxu0 %v760
      %806 = vmatpush1.msra.mxu0 %v756
      %807 = vmatprep.subr.mxu0 %v761
      %808 = vmatpush1.msra.mxu0 %v757
      %809 = vmatprep.subr.mxu0 %v762
      %810 = vmatpush1.msra.mxu0 %v758
      %811 = vmatprep.subr.mxu0 %v783
      %812 = vmatpush1.msra.mxu0 %v779
      %813 = vmatprep.subr.mxu0 %v784
      %814 = vmatpush1.msra.mxu0 %v780
      %815 = vmatprep.subr.mxu0 %v785
      %816 = vmatpush1.msra.mxu0 %v781
      %817 = vmatprep.subr.mxu0 %v786
      %818 = vmatpush1.msra.mxu0 %v782
      %819 = vmatprep.subr.mxu0 0.0
      %820 = vmatpush1.msra.mxu0 0.0
      %821 = vmatprep.subr.mxu0 0.0
      %822 = vmatpush1.msra.mxu0 0.0
      %823 = vmatprep.subr.mxu0 0.0
      %824 = vmatpush1.msra.mxu0 0.0
      %825 = vmatprep.subr.mxu0 0.0
      %826 = vmatpush1.msra.mxu0 0.0
      %827 = vmatprep.subr.mxu0 0.0
      %828 = vmatpush1.msra.mxu0 0.0
      %829 = vmatprep.subr.mxu0 0.0
      %830 = vmatpush1.msra.mxu0 0.0
      %831 = vmatprep.subr.mxu0 0.0
      %832 = vmatpush1.msra.mxu0 0.0
      %833 = vmatprep.subr.mxu0 0.0
      %834 = vmatpush1.msra.mxu0 0.0
      %835 = vmatprep.subr.mxu0 0.0
      %836 = vmatpush1.msra.mxu0 0.0
      %837 = vmatprep.subr.mxu0 0.0
      %838 = vmatpush1.msra.mxu0 0.0
      %839 = vmatprep.subr.mxu0 0.0
      %840 = vmatpush1.msra.mxu0 0.0
      %841 = vmatprep.subr.mxu0 0.0
      %842 = vmatpush1.msra.mxu0 0.0
      %843 = vmatprep.subr.mxu0 0.0
      %844 = vmatpush1.msra.mxu0 0.0
      %845 = vmatprep.subr.mxu0 0.0
      %846 = vmatpush1.msra.mxu0 0.0
      %847 = vmatprep.subr.mxu0 0.0
      %848 = vmatpush1.msra.mxu0 0.0
      %849 = vmatprep.subr.mxu0 0.0
      %850 = vmatpush1.msra.mxu0 0.0
      %851 = vmatprep.mubr.f32.mxu0 0.0
      %852 = vmatmul.mubr.f32.gmra.mrb[0].mxu0 %v711
      %v853 = vpop.f32.mrb[0].mxu0
      %v854 = vadd.f32 0.0, %v853
      %v855 = vpop.f32.mrb[0].mxu0
      %v856 = vadd.f32 0.0, %v855
      %857 = vmatprep.mubr.f32.mxu0 0.0
      %858 = vmatmul.mubr.f32.gmra.mrb[0].mxu0 %v712
      %v859 = vpop.f32.mrb[0].mxu0
      %v860 = vadd.f32 0.0, %v859
      %v861 = vpop.f32.mrb[0].mxu0
      %v862 = vadd.f32 0.0, %v861
      %863 = vmatprep.mubr.f32.mxu0 0.0
      %864 = vmatmul.mubr.f32.gmra.mrb[0].mxu0 %v713
      %v865 = vpop.f32.mrb[0].mxu0
      %v866 = vadd.f32 0.0, %v865
      %v867 = vpop.f32.mrb[0].mxu0
      %v868 = vadd.f32 0.0, %v867
      %869 = vmatprep.mubr.f32.mxu0 0.0
      %870 = vmatmul.mubr.f32.gmra.mrb[0].mxu0 %v714
      %v871 = vpop.f32.mrb[0].mxu0
      %v872 = vadd.f32 0.0, %v871
      %v873 = vpop.f32.mrb[0].mxu0
      %v874 = vadd.f32 0.0, %v873
      %875 = vdwg.mxu0
      %v876 = vmax.f32 %v854, 0.0
      %v877 = vmax.f32 %v856, 0.0
      %v878 = vmax.f32 %v860, 0.0
      %v879 = vmax.f32 %v862, 0.0
      %v880 = vmax.f32 %v866, 0.0
      %v881 = vmax.f32 %v868, 0.0
      %v882 = vmax.f32 %v872, 0.0
      %v883 = vmax.f32 %v874, 0.0
      %s884 = scalar_lea.vmem %s2, 96
      %v885 = vld [vmem:[%s884] sm:$0xff]
      %v886 = vld [vmem:[%s884 + $0x8] sm:$0xff]
      %v887 = vld [vmem:[%s884 + $0x10] sm:$0xff]
      %v888 = vld [vmem:[%s884 + $0x18] sm:$0xff]
      %889 = vrot.lane.b32.xlu0 %v876, 127
      %v890 = vpop.permute.xlu0 %889
      %891 = vrot.lane.b32.xlu0 %v878, 127
      %v892 = vpop.permute.xlu0 %891
      %893 = vrot.lane.b32.xlu0 %v880, 127
      %v894 = vpop.permute.xlu0 %893
      %895 = vrot.lane.b32.xlu0 %v882, 127
      %v896 = vpop.permute.xlu0 %895
      %897 = vrot.lane.b32.xlu0 %v877, 127
      %v898 = vpop.permute.xlu0 %897
      %899 = vrot.lane.b32.xlu0 %v879, 127
      %v900 = vpop.permute.xlu0 %899
      %901 = vrot.lane.b32.xlu0 %v881, 127
      %v902 = vpop.permute.xlu0 %901
      %903 = vrot.lane.b32.xlu0 %v883, 127
      %v904 = vpop.permute.xlu0 %903
      %v905 = vsel %vm236, %v890, %v898
      %v906 = vsel %vm236, %v892, %v900
      %v907 = vsel %vm236, %v894, %v902
      %v908 = vsel %vm236, %v896, %v904
      %v909 = vsel %vm236, %v898, %v890
      %v910 = vsel %vm236, %v900, %v892
      %v911 = vsel %vm236, %v902, %v894
      %v912 = vsel %vm236, %v904, %v896
      %913 = vrot.lane.b32.xlu0 %v876, 112
      %v914 = vpop.permute.xlu0 %913
      %915 = vrot.lane.b32.xlu0 %v878, 112
      %v916 = vpop.permute.xlu0 %915
      %917 = vrot.lane.b32.xlu0 %v880, 112
      %v918 = vpop.permute.xlu0 %917
      %919 = vrot.lane.b32.xlu0 %v882, 112
      %v920 = vpop.permute.xlu0 %919
      %921 = vrot.lane.b32.xlu0 %v877, 112
      %v922 = vpop.permute.xlu0 %921
      %923 = vrot.lane.b32.xlu0 %v879, 112
      %v924 = vpop.permute.xlu0 %923
      %925 = vrot.lane.b32.xlu0 %v881, 112
      %v926 = vpop.permute.xlu0 %925
      %927 = vrot.lane.b32.xlu0 %v883, 112
      %v928 = vpop.permute.xlu0 %927
      %v929 = vsel %vm243, %v914, %v922
      %v930 = vsel %vm243, %v916, %v924
      %v931 = vsel %vm243, %v918, %v926
      %v932 = vsel %vm243, %v920, %v928
      %v933 = vsel %vm243, %v922, %v914
      %v934 = vsel %vm243, %v924, %v916
      %v935 = vsel %vm243, %v926, %v918
      %v936 = vsel %vm243, %v928, %v920
      %937 = vrot.lane.b32.xlu0 %v876, 111
      %v938 = vpop.permute.xlu0 %937
      %939 = vrot.lane.b32.xlu0 %v878, 111
      %v940 = vpop.permute.xlu0 %939
      %941 = vrot.lane.b32.xlu0 %v880, 111
      %v942 = vpop.permute.xlu0 %941
      %943 = vrot.lane.b32.xlu0 %v882, 111
      %v944 = vpop.permute.xlu0 %943
      %945 = vrot.lane.b32.xlu0 %v877, 111
      %v946 = vpop.permute.xlu0 %945
      %947 = vrot.lane.b32.xlu0 %v879, 111
      %v948 = vpop.permute.xlu0 %947
      %949 = vrot.lane.b32.xlu0 %v881, 111
      %v950 = vpop.permute.xlu0 %949
      %951 = vrot.lane.b32.xlu0 %v883, 111
      %v952 = vpop.permute.xlu0 %951
      %v953 = vsel %vm250, %v938, %v946
      %v954 = vsel %vm250, %v940, %v948
      %v955 = vsel %vm250, %v942, %v950
      %v956 = vsel %vm250, %v944, %v952
      %v957 = vsel %vm250, %v946, %v938
      %v958 = vsel %vm250, %v948, %v940
      %v959 = vsel %vm250, %v950, %v942
      %v960 = vsel %vm250, %v952, %v944
      %961 = vmatprep.subr.mxu0 %v877
      %962 = vmatpush1.msra.mxu0 %v876
      %963 = vmatprep.subr.mxu0 %v879
      %964 = vmatpush1.msra.mxu0 %v878
      %965 = vmatprep.subr.mxu0 %v881
      %966 = vmatpush1.msra.mxu0 %v880
      %967 = vmatprep.subr.mxu0 %v883
      %968 = vmatpush1.msra.mxu0 %v882
      %969 = vmatprep.subr.mxu0 %v909
      %970 = vmatpush1.msra.mxu0 %v905
      %971 = vmatprep.subr.mxu0 %v910
      %972 = vmatpush1.msra.mxu0 %v906
      %973 = vmatprep.subr.mxu0 %v911
      %974 = vmatpush1.msra.mxu0 %v907
      %975 = vmatprep.subr.mxu0 %v912
      %976 = vmatpush1.msra.mxu0 %v908
      %977 = vmatprep.subr.mxu0 %v933
      %978 = vmatpush1.msra.mxu0 %v929
      %979 = vmatprep.subr.mxu0 %v934
      %980 = vmatpush1.msra.mxu0 %v930
      %981 = vmatprep.subr.mxu0 %v935
      %982 = vmatpush1.msra.mxu0 %v931
      %983 = vmatprep.subr.mxu0 %v936
      %984 = vmatpush1.msra.mxu0 %v932
      %985 = vmatprep.subr.mxu0 %v957
      %986 = vmatpush1.msra.mxu0 %v953
      %987 = vmatprep.subr.mxu0 %v958
      %988 = vmatpush1.msra.mxu0 %v954
      %989 = vmatprep.subr.mxu0 %v959
      %990 = vmatpush1.msra.mxu0 %v955
      %991 = vmatprep.subr.mxu0 %v960
      %992 = vmatpush1.msra.mxu0 %v956
      %993 = vmatprep.subr.mxu0 0.0
      %994 = vmatpush1.msra.mxu0 0.0
      %995 = vmatprep.subr.mxu0 0.0
      %996 = vmatpush1.msra.mxu0 0.0
      %997 = vmatprep.subr.mxu0 0.0
      %998 = vmatpush1.msra.mxu0 0.0
      %999 = vmatprep.subr.mxu0 0.0
      %1000 = vmatpush1.msra.mxu0 0.0
      %1001 = vmatprep.subr.mxu0 0.0
      %1002 = vmatpush1.msra.mxu0 0.0
      %1003 = vmatprep.subr.mxu0 0.0
      %1004 = vmatpush1.msra.mxu0 0.0
      %1005 = vmatprep.subr.mxu0 0.0
      %1006 = vmatpush1.msra.mxu0 0.0
      %1007 = vmatprep.subr.mxu0 0.0
      %1008 = vmatpush1.msra.mxu0 0.0
      %1009 = vmatprep.subr.mxu0 0.0
      %1010 = vmatpush1.msra.mxu0 0.0
      %1011 = vmatprep.subr.mxu0 0.0
      %1012 = vmatpush1.msra.mxu0 0.0
      %1013 = vmatprep.subr.mxu0 0.0
      %1014 = vmatpush1.msra.mxu0 0.0
      %1015 = vmatprep.subr.mxu0 0.0
      %1016 = vmatpush1.msra.mxu0 0.0
      %1017 = vmatprep.subr.mxu0 0.0
      %1018 = vmatpush1.msra.mxu0 0.0
      %1019 = vmatprep.subr.mxu0 0.0
      %1020 = vmatpush1.msra.mxu0 0.0
      %1021 = vmatprep.subr.mxu0 0.0
      %1022 = vmatpush1.msra.mxu0 0.0
      %1023 = vmatprep.subr.mxu0 0.0
      %1024 = vmatpush1.msra.mxu0 0.0
      %1025 = vmatprep.mubr.f32.mxu0 0.0
      %1026 = vmatmul.mubr.f32.gmra.mrb[0].mxu0 %v885
      %v1027 = vpop.f32.mrb[0].mxu0
      %v1028 = vadd.f32 0.0, %v1027
      %v1029 = vpop.f32.mrb[0].mxu0
      %v1030 = vadd.f32 0.0, %v1029
      %1031 = vmatprep.mubr.f32.mxu0 0.0
      %1032 = vmatmul.mubr.f32.gmra.mrb[0].mxu0 %v886
      %v1033 = vpop.f32.mrb[0].mxu0
      %v1034 = vadd.f32 0.0, %v1033
      %v1035 = vpop.f32.mrb[0].mxu0
      %v1036 = vadd.f32 0.0, %v1035
      %1037 = vmatprep.mubr.f32.mxu0 0.0
      %1038 = vmatmul.mubr.f32.gmra.mrb[0].mxu0 %v887
      %v1039 = vpop.f32.mrb[0].mxu0
      %v1040 = vadd.f32 0.0, %v1039
      %v1041 = vpop.f32.mrb[0].mxu0
      %v1042 = vadd.f32 0.0, %v1041
      %1043 = vmatprep.mubr.f32.mxu0 0.0
      %1044 = vmatmul.mubr.f32.gmra.mrb[0].mxu0 %v888
      %v1045 = vpop.f32.mrb[0].mxu0
      %v1046 = vadd.f32 0.0, %v1045
      %v1047 = vpop.f32.mrb[0].mxu0
      %v1048 = vadd.f32 0.0, %v1047
      %1049 = vdwg.mxu0
      %v1050 = vmax.f32 %v1028, 0.0
      %v1051 = vmax.f32 %v1030, 0.0
      %v1052 = vmax.f32 %v1034, 0.0
      %v1053 = vmax.f32 %v1036, 0.0
      %v1054 = vmax.f32 %v1040, 0.0
      %v1055 = vmax.f32 %v1042, 0.0
      %v1056 = vmax.f32 %v1046, 0.0
      %v1057 = vmax.f32 %v1048, 0.0
      %s1058 = scalar_lea.vmem %s2, 128
      %v1059 = vld [vmem:[%s1058] sm:$0xff]
      %v1060 = vld [vmem:[%s1058 + $0x8] sm:$0xff]
      %v1061 = vld [vmem:[%s1058 + $0x10] sm:$0xff]
      %v1062 = vld [vmem:[%s1058 + $0x18] sm:$0xff]
      %1063 = vrot.lane.b32.xlu0 %v1050, 127
      %v1064 = vpop.permute.xlu0 %1063
      %1065 = vrot.lane.b32.xlu0 %v1052, 127
      %v1066 = vpop.permute.xlu0 %1065
      %1067 = vrot.lane.b32.xlu0 %v1054, 127
      %v1068 = vpop.permute.xlu0 %1067
      %1069 = vrot.lane.b32.xlu0 %v1056, 127
      %v1070 = vpop.permute.xlu0 %1069
      %1071 = vrot.lane.b32.xlu0 %v1051, 127
      %v1072 = vpop.permute.xlu0 %1071
      %1073 = vrot.lane.b32.xlu0 %v1053, 127
      %v1074 = vpop.permute.xlu0 %1073
      %1075 = vrot.lane.b32.xlu0 %v1055, 127
      %v1076 = vpop.permute.xlu0 %1075
      %1077 = vrot.lane.b32.xlu0 %v1057, 127
      %v1078 = vpop.permute.xlu0 %1077
      %v1079 = vsel %vm236, %v1064, %v1072
      %v1080 = vsel %vm236, %v1066, %v1074
      %v1081 = vsel %vm236, %v1068, %v1076
      %v1082 = vsel %vm236, %v1070, %v1078
      %v1083 = vsel %vm236, %v1072, %v1064
      %v1084 = vsel %vm236, %v1074, %v1066
      %v1085 = vsel %vm236, %v1076, %v1068
      %v1086 = vsel %vm236, %v1078, %v1070
      %1087 = vrot.lane.b32.xlu0 %v1050, 112
      %v1088 = vpop.permute.xlu0 %1087
      %1089 = vrot.lane.b32.xlu0 %v1052, 112
      %v1090 = vpop.permute.xlu0 %1089
      %1091 = vrot.lane.b32.xlu0 %v1054, 112
      %v1092 = vpop.permute.xlu0 %1091
      %1093 = vrot.lane.b32.xlu0 %v1056, 112
      %v1094 = vpop.permute.xlu0 %1093
      %1095 = vrot.lane.b32.xlu0 %v1051, 112
      %v1096 = vpop.permute.xlu0 %1095
      %1097 = vrot.lane.b32.xlu0 %v1053, 112
      %v1098 = vpop.permute.xlu0 %1097
      %1099 = vrot.lane.b32.xlu0 %v1055, 112
      %v1100 = vpop.permute.xlu0 %1099
      %1101 = vrot.lane.b32.xlu0 %v1057, 112
      %v1102 = vpop.permute.xlu0 %1101
      %v1103 = vsel %vm243, %v1088, %v1096
      %v1104 = vsel %vm243, %v1090, %v1098
      %v1105 = vsel %vm243, %v1092, %v1100
      %v1106 = vsel %vm243, %v1094, %v1102
      %v1107 = vsel %vm243, %v1096, %v1088
      %v1108 = vsel %vm243, %v1098, %v1090
      %v1109 = vsel %vm243, %v1100, %v1092
      %v1110 = vsel %vm243, %v1102, %v1094
      %1111 = vrot.lane.b32.xlu0 %v1050, 111
      %v1112 = vpop.permute.xlu0 %1111
      %1113 = vrot.lane.b32.xlu0 %v1052, 111
      %v1114 = vpop.permute.xlu0 %1113
      %1115 = vrot.lane.b32.xlu0 %v1054, 111
      %v1116 = vpop.permute.xlu0 %1115
      %1117 = vrot.lane.b32.xlu0 %v1056, 111
      %v1118 = vpop.permute.xlu0 %1117
      %1119 = vrot.lane.b32.xlu0 %v1051, 111
      %v1120 = vpop.permute.xlu0 %1119
      %1121 = vrot.lane.b32.xlu0 %v1053, 111
      %v1122 = vpop.permute.xlu0 %1121
      %1123 = vrot.lane.b32.xlu0 %v1055, 111
      %v1124 = vpop.permute.xlu0 %1123
      %1125 = vrot.lane.b32.xlu0 %v1057, 111
      %v1126 = vpop.permute.xlu0 %1125
      %v1127 = vsel %vm250, %v1112, %v1120
      %v1128 = vsel %vm250, %v1114, %v1122
      %v1129 = vsel %vm250, %v1116, %v1124
      %v1130 = vsel %vm250, %v1118, %v1126
      %v1131 = vsel %vm250, %v1120, %v1112
      %v1132 = vsel %vm250, %v1122, %v1114
      %v1133 = vsel %vm250, %v1124, %v1116
      %v1134 = vsel %vm250, %v1126, %v1118
      %1135 = vmatprep.subr.mxu0 %v1051
      %1136 = vmatpush1.msra.mxu0 %v1050
      %1137 = vmatprep.subr.mxu0 %v1053
      %1138 = vmatpush1.msra.mxu0 %v1052
      %1139 = vmatprep.subr.mxu0 %v1055
      %1140 = vmatpush1.msra.mxu0 %v1054
      %1141 = vmatprep.subr.mxu0 %v1057
      %1142 = vmatpush1.msra.mxu0 %v1056
      %1143 = vmatprep.subr.mxu0 %v1083
      %1144 = vmatpush1.msra.mxu0 %v1079
      %1145 = vmatprep.subr.mxu0 %v1084
      %1146 = vmatpush1.msra.mxu0 %v1080
      %1147 = vmatprep.subr.mxu0 %v1085
      %1148 = vmatpush1.msra.mxu0 %v1081
      %1149 = vmatprep.subr.mxu0 %v1086
      %1150 = vmatpush1.msra.mxu0 %v1082
      %1151 = vmatprep.subr.mxu0 %v1107
      %1152 = vmatpush1.msra.mxu0 %v1103
      %1153 = vmatprep.subr.mxu0 %v1108
      %1154 = vmatpush1.msra.mxu0 %v1104
      %1155 = vmatprep.subr.mxu0 %v1109
      %1156 = vmatpush1.msra.mxu0 %v1105
      %1157 = vmatprep.subr.mxu0 %v1110
      %1158 = vmatpush1.msra.mxu0 %v1106
      %1159 = vmatprep.subr.mxu0 %v1131
      %1160 = vmatpush1.msra.mxu0 %v1127
      %1161 = vmatprep.subr.mxu0 %v1132
      %1162 = vmatpush1.msra.mxu0 %v1128
      %1163 = vmatprep.subr.mxu0 %v1133
      %1164 = vmatpush1.msra.mxu0 %v1129
      %1165 = vmatprep.subr.mxu0 %v1134
      %1166 = vmatpush1.msra.mxu0 %v1130
      %1167 = vmatprep.subr.mxu0 0.0
      %1168 = vmatpush1.msra.mxu0 0.0
      %1169 = vmatprep.subr.mxu0 0.0
      %1170 = vmatpush1.msra.mxu0 0.0
      %1171 = vmatprep.subr.mxu0 0.0
      %1172 = vmatpush1.msra.mxu0 0.0
      %1173 = vmatprep.subr.mxu0 0.0
      %1174 = vmatpush1.msra.mxu0 0.0
      %1175 = vmatprep.subr.mxu0 0.0
      %1176 = vmatpush1.msra.mxu0 0.0
      %1177 = vmatprep.subr.mxu0 0.0
      %1178 = vmatpush1.msra.mxu0 0.0
      %1179 = vmatprep.subr.mxu0 0.0
      %1180 = vmatpush1.msra.mxu0 0.0
      %1181 = vmatprep.subr.mxu0 0.0
      %1182 = vmatpush1.msra.mxu0 0.0
      %1183 = vmatprep.subr.mxu0 0.0
      %1184 = vmatpush1.msra.mxu0 0.0
      %1185 = vmatprep.subr.mxu0 0.0
      %1186 = vmatpush1.msra.mxu0 0.0
      %1187 = vmatprep.subr.mxu0 0.0
      %1188 = vmatpush1.msra.mxu0 0.0
      %1189 = vmatprep.subr.mxu0 0.0
      %1190 = vmatpush1.msra.mxu0 0.0
      %1191 = vmatprep.subr.mxu0 0.0
      %1192 = vmatpush1.msra.mxu0 0.0
      %1193 = vmatprep.subr.mxu0 0.0
      %1194 = vmatpush1.msra.mxu0 0.0
      %1195 = vmatprep.subr.mxu0 0.0
      %1196 = vmatpush1.msra.mxu0 0.0
      %1197 = vmatprep.subr.mxu0 0.0
      %1198 = vmatpush1.msra.mxu0 0.0
      %1199 = vmatprep.mubr.f32.mxu0 0.0
      %1200 = vmatmul.mubr.f32.gmra.mrb[0].mxu0 %v1059
      %v1201 = vpop.f32.mrb[0].mxu0
      %v1202 = vadd.f32 0.0, %v1201
      %v1203 = vpop.f32.mrb[0].mxu0
      %v1204 = vadd.f32 0.0, %v1203
      %1205 = vmatprep.mubr.f32.mxu0 0.0
      %1206 = vmatmul.mubr.f32.gmra.mrb[0].mxu0 %v1060
      %v1207 = vpop.f32.mrb[0].mxu0
      %v1208 = vadd.f32 0.0, %v1207
      %v1209 = vpop.f32.mrb[0].mxu0
      %v1210 = vadd.f32 0.0, %v1209
      %1211 = vmatprep.mubr.f32.mxu0 0.0
      %1212 = vmatmul.mubr.f32.gmra.mrb[0].mxu0 %v1061
      %v1213 = vpop.f32.mrb[0].mxu0
      %v1214 = vadd.f32 0.0, %v1213
      %v1215 = vpop.f32.mrb[0].mxu0
      %v1216 = vadd.f32 0.0, %v1215
      %1217 = vmatprep.mubr.f32.mxu0 0.0
      %1218 = vmatmul.mubr.f32.gmra.mrb[0].mxu0 %v1062
      %v1219 = vpop.f32.mrb[0].mxu0
      %v1220 = vadd.f32 0.0, %v1219
      %v1221 = vpop.f32.mrb[0].mxu0
      %v1222 = vadd.f32 0.0, %v1221
      %1223 = vdwg.mxu0
      %v1224 = vmax.f32 %v1202, 0.0
      %v1225 = vmax.f32 %v1204, 0.0
      %v1226 = vmax.f32 %v1208, 0.0
      %v1227 = vmax.f32 %v1210, 0.0
      %v1228 = vmax.f32 %v1214, 0.0
      %v1229 = vmax.f32 %v1216, 0.0
      %v1230 = vmax.f32 %v1220, 0.0
      %v1231 = vmax.f32 %v1222, 0.0
      %s1232 = scalar_lea.vmem %s2, 160
      %v1233 = vld [vmem:[%s1232] sm:$0xff]
      %v1234 = vld [vmem:[%s1232 + $0x8] sm:$0xff]
      %v1235 = vld [vmem:[%s1232 + $0x10] sm:$0xff]
      %v1236 = vld [vmem:[%s1232 + $0x18] sm:$0xff]
      %1237 = vrot.lane.b32.xlu0 %v1224, 127
      %v1238 = vpop.permute.xlu0 %1237
      %1239 = vrot.lane.b32.xlu0 %v1226, 127
      %v1240 = vpop.permute.xlu0 %1239
      %1241 = vrot.lane.b32.xlu0 %v1228, 127
      %v1242 = vpop.permute.xlu0 %1241
      %1243 = vrot.lane.b32.xlu0 %v1230, 127
      %v1244 = vpop.permute.xlu0 %1243
      %1245 = vrot.lane.b32.xlu0 %v1225, 127
      %v1246 = vpop.permute.xlu0 %1245
      %1247 = vrot.lane.b32.xlu0 %v1227, 127
      %v1248 = vpop.permute.xlu0 %1247
      %1249 = vrot.lane.b32.xlu0 %v1229, 127
      %v1250 = vpop.permute.xlu0 %1249
      %1251 = vrot.lane.b32.xlu0 %v1231, 127
      %v1252 = vpop.permute.xlu0 %1251
      %v1253 = vsel %vm236, %v1238, %v1246
      %v1254 = vsel %vm236, %v1240, %v1248
      %v1255 = vsel %vm236, %v1242, %v1250
      %v1256 = vsel %vm236, %v1244, %v1252
      %v1257 = vsel %vm236, %v1246, %v1238
      %v1258 = vsel %vm236, %v1248, %v1240
      %v1259 = vsel %vm236, %v1250, %v1242
      %v1260 = vsel %vm236, %v1252, %v1244
      %1261 = vrot.lane.b32.xlu0 %v1224, 112
      %v1262 = vpop.permute.xlu0 %1261
      %1263 = vrot.lane.b32.xlu0 %v1226, 112
      %v1264 = vpop.permute.xlu0 %1263
      %1265 = vrot.lane.b32.xlu0 %v1228, 112
      %v1266 = vpop.permute.xlu0 %1265
      %1267 = vrot.lane.b32.xlu0 %v1230, 112
      %v1268 = vpop.permute.xlu0 %1267
      %1269 = vrot.lane.b32.xlu0 %v1225, 112
      %v1270 = vpop.permute.xlu0 %1269
      %1271 = vrot.lane.b32.xlu0 %v1227, 112
      %v1272 = vpop.permute.xlu0 %1271
      %1273 = vrot.lane.b32.xlu0 %v1229, 112
      %v1274 = vpop.permute.xlu0 %1273
      %1275 = vrot.lane.b32.xlu0 %v1231, 112
      %v1276 = vpop.permute.xlu0 %1275
      %v1277 = vsel %vm243, %v1262, %v1270
      %v1278 = vsel %vm243, %v1264, %v1272
      %v1279 = vsel %vm243, %v1266, %v1274
      %v1280 = vsel %vm243, %v1268, %v1276
      %v1281 = vsel %vm243, %v1270, %v1262
      %v1282 = vsel %vm243, %v1272, %v1264
      %v1283 = vsel %vm243, %v1274, %v1266
      %v1284 = vsel %vm243, %v1276, %v1268
      %1285 = vrot.lane.b32.xlu0 %v1224, 111
      %v1286 = vpop.permute.xlu0 %1285
      %1287 = vrot.lane.b32.xlu0 %v1226, 111
      %v1288 = vpop.permute.xlu0 %1287
      %1289 = vrot.lane.b32.xlu0 %v1228, 111
      %v1290 = vpop.permute.xlu0 %1289
      %1291 = vrot.lane.b32.xlu0 %v1230, 111
      %v1292 = vpop.permute.xlu0 %1291
      %1293 = vrot.lane.b32.xlu0 %v1225, 111
      %v1294 = vpop.permute.xlu0 %1293
      %1295 = vrot.lane.b32.xlu0 %v1227, 111
      %v1296 = vpop.permute.xlu0 %1295
      %1297 = vrot.lane.b32.xlu0 %v1229, 111
      %v1298 = vpop.permute.xlu0 %1297
      %1299 = vrot.lane.b32.xlu0 %v1231, 111
      %v1300 = vpop.permute.xlu0 %1299
      %v1301 = vsel %vm250, %v1286, %v1294
      %v1302 = vsel %vm250, %v1288, %v1296
      %v1303 = vsel %vm250, %v1290, %v1298
      %v1304 = vsel %vm250, %v1292, %v1300
      %v1305 = vsel %vm250, %v1294, %v1286
      %v1306 = vsel %vm250, %v1296, %v1288
      %v1307 = vsel %vm250, %v1298, %v1290
      %v1308 = vsel %vm250, %v1300, %v1292
      %1309 = vmatprep.subr.mxu0 %v1225
      %1310 = vmatpush1.msra.mxu0 %v1224
      %1311 = vmatprep.subr.mxu0 %v1227
      %1312 = vmatpush1.msra.mxu0 %v1226
      %1313 = vmatprep.subr.mxu0 %v1229
      %1314 = vmatpush1.msra.mxu0 %v1228
      %1315 = vmatprep.subr.mxu0 %v1231
      %1316 = vmatpush1.msra.mxu0 %v1230
      %1317 = vmatprep.subr.mxu0 %v1257
      %1318 = vmatpush1.msra.mxu0 %v1253
      %1319 = vmatprep.subr.mxu0 %v1258
      %1320 = vmatpush1.msra.mxu0 %v1254
      %1321 = vmatprep.subr.mxu0 %v1259
      %1322 = vmatpush1.msra.mxu0 %v1255
      %1323 = vmatprep.subr.mxu0 %v1260
      %1324 = vmatpush1.msra.mxu0 %v1256
      %1325 = vmatprep.subr.mxu0 %v1281
      %1326 = vmatpush1.msra.mxu0 %v1277
      %1327 = vmatprep.subr.mxu0 %v1282
      %1328 = vmatpush1.msra.mxu0 %v1278
      %1329 = vmatprep.subr.mxu0 %v1283
      %1330 = vmatpush1.msra.mxu0 %v1279
      %1331 = vmatprep.subr.mxu0 %v1284
      %1332 = vmatpush1.msra.mxu0 %v1280
      %1333 = vmatprep.subr.mxu0 %v1305
      %1334 = vmatpush1.msra.mxu0 %v1301
      %1335 = vmatprep.subr.mxu0 %v1306
      %1336 = vmatpush1.msra.mxu0 %v1302
      %1337 = vmatprep.subr.mxu0 %v1307
      %1338 = vmatpush1.msra.mxu0 %v1303
      %1339 = vmatprep.subr.mxu0 %v1308
      %1340 = vmatpush1.msra.mxu0 %v1304
      %1341 = vmatprep.subr.mxu0 0.0
      %1342 = vmatpush1.msra.mxu0 0.0
      %1343 = vmatprep.subr.mxu0 0.0
      %1344 = vmatpush1.msra.mxu0 0.0
      %1345 = vmatprep.subr.mxu0 0.0
      %1346 = vmatpush1.msra.mxu0 0.0
      %1347 = vmatprep.subr.mxu0 0.0
      %1348 = vmatpush1.msra.mxu0 0.0
      %1349 = vmatprep.subr.mxu0 0.0
      %1350 = vmatpush1.msra.mxu0 0.0
      %1351 = vmatprep.subr.mxu0 0.0
      %1352 = vmatpush1.msra.mxu0 0.0
      %1353 = vmatprep.subr.mxu0 0.0
      %1354 = vmatpush1.msra.mxu0 0.0
      %1355 = vmatprep.subr.mxu0 0.0
      %1356 = vmatpush1.msra.mxu0 0.0
      %1357 = vmatprep.subr.mxu0 0.0
      %1358 = vmatpush1.msra.mxu0 0.0
      %1359 = vmatprep.subr.mxu0 0.0
      %1360 = vmatpush1.msra.mxu0 0.0
      %1361 = vmatprep.subr.mxu0 0.0
      %1362 = vmatpush1.msra.mxu0 0.0
      %1363 = vmatprep.subr.mxu0 0.0
      %1364 = vmatpush1.msra.mxu0 0.0
      %1365 = vmatprep.subr.mxu0 0.0
      %1366 = vmatpush1.msra.mxu0 0.0
      %1367 = vmatprep.subr.mxu0 0.0
      %1368 = vmatpush1.msra.mxu0 0.0
      %1369 = vmatprep.subr.mxu0 0.0
      %1370 = vmatpush1.msra.mxu0 0.0
      %1371 = vmatprep.subr.mxu0 0.0
      %1372 = vmatpush1.msra.mxu0 0.0
      %1373 = vmatprep.mubr.f32.mxu0 0.0
      %1374 = vmatmul.mubr.f32.gmra.mrb[0].mxu0 %v1233
      %v1375 = vpop.f32.mrb[0].mxu0
      %v1376 = vadd.f32 0.0, %v1375
      %v1377 = vpop.f32.mrb[0].mxu0
      %v1378 = vadd.f32 0.0, %v1377
      %1379 = vmatprep.mubr.f32.mxu0 0.0
      %1380 = vmatmul.mubr.f32.gmra.mrb[0].mxu0 %v1234
      %v1381 = vpop.f32.mrb[0].mxu0
      %v1382 = vadd.f32 0.0, %v1381
      %v1383 = vpop.f32.mrb[0].mxu0
      %v1384 = vadd.f32 0.0, %v1383
      %1385 = vmatprep.mubr.f32.mxu0 0.0
      %1386 = vmatmul.mubr.f32.gmra.mrb[0].mxu0 %v1235
      %v1387 = vpop.f32.mrb[0].mxu0
      %v1388 = vadd.f32 0.0, %v1387
      %v1389 = vpop.f32.mrb[0].mxu0
      %v1390 = vadd.f32 0.0, %v1389
      %1391 = vmatprep.mubr.f32.mxu0 0.0
      %1392 = vmatmul.mubr.f32.gmra.mrb[0].mxu0 %v1236
      %v1393 = vpop.f32.mrb[0].mxu0
      %v1394 = vadd.f32 0.0, %v1393
      %v1395 = vpop.f32.mrb[0].mxu0
      %v1396 = vadd.f32 0.0, %v1395
      %1397 = vdwg.mxu0
      %v1398 = vmax.f32 %v1376, 0.0
      %v1399 = vmax.f32 %v1378, 0.0
      %v1400 = vmax.f32 %v1382, 0.0
      %v1401 = vmax.f32 %v1384, 0.0
      %v1402 = vmax.f32 %v1388, 0.0
      %v1403 = vmax.f32 %v1390, 0.0
      %v1404 = vmax.f32 %v1394, 0.0
      %v1405 = vmax.f32 %v1396, 0.0
      %s1406 = scalar_lea.vmem %s2, 192
      %v1407 = vld [vmem:[%s1406] sm:$0xff]
      %v1408 = vld [vmem:[%s1406 + $0x8] sm:$0xff]
      %v1409 = vld [vmem:[%s1406 + $0x10] sm:$0xff]
      %v1410 = vld [vmem:[%s1406 + $0x18] sm:$0xff]
      %1411 = vrot.lane.b32.xlu0 %v1398, 127
      %v1412 = vpop.permute.xlu0 %1411
      %1413 = vrot.lane.b32.xlu0 %v1400, 127
      %v1414 = vpop.permute.xlu0 %1413
      %1415 = vrot.lane.b32.xlu0 %v1402, 127
      %v1416 = vpop.permute.xlu0 %1415
      %1417 = vrot.lane.b32.xlu0 %v1404, 127
      %v1418 = vpop.permute.xlu0 %1417
      %1419 = vrot.lane.b32.xlu0 %v1399, 127
      %v1420 = vpop.permute.xlu0 %1419
      %1421 = vrot.lane.b32.xlu0 %v1401, 127
      %v1422 = vpop.permute.xlu0 %1421
      %1423 = vrot.lane.b32.xlu0 %v1403, 127
      %v1424 = vpop.permute.xlu0 %1423
      %1425 = vrot.lane.b32.xlu0 %v1405, 127
      %v1426 = vpop.permute.xlu0 %1425
      %v1427 = vsel %vm236, %v1412, %v1420
      %v1428 = vsel %vm236, %v1414, %v1422
      %v1429 = vsel %vm236, %v1416, %v1424
      %v1430 = vsel %vm236, %v1418, %v1426
      %v1431 = vsel %vm236, %v1420, %v1412
      %v1432 = vsel %vm236, %v1422, %v1414
      %v1433 = vsel %vm236, %v1424, %v1416
      %v1434 = vsel %vm236, %v1426, %v1418
      %1435 = vrot.lane.b32.xlu0 %v1398, 112
      %v1436 = vpop.permute.xlu0 %1435
      %1437 = vrot.lane.b32.xlu0 %v1400, 112
      %v1438 = vpop.permute.xlu0 %1437
      %1439 = vrot.lane.b32.xlu0 %v1402, 112
      %v1440 = vpop.permute.xlu0 %1439
      %1441 = vrot.lane.b32.xlu0 %v1404, 112
      %v1442 = vpop.permute.xlu0 %1441
      %1443 = vrot.lane.b32.xlu0 %v1399, 112
      %v1444 = vpop.permute.xlu0 %1443
      %1445 = vrot.lane.b32.xlu0 %v1401, 112
      %v1446 = vpop.permute.xlu0 %1445
      %1447 = vrot.lane.b32.xlu0 %v1403, 112
      %v1448 = vpop.permute.xlu0 %1447
      %1449 = vrot.lane.b32.xlu0 %v1405, 112
      %v1450 = vpop.permute.xlu0 %1449
      %v1451 = vsel %vm243, %v1436, %v1444
      %v1452 = vsel %vm243, %v1438, %v1446
      %v1453 = vsel %vm243, %v1440, %v1448
      %v1454 = vsel %vm243, %v1442, %v1450
      %v1455 = vsel %vm243, %v1444, %v1436
      %v1456 = vsel %vm243, %v1446, %v1438
      %v1457 = vsel %vm243, %v1448, %v1440
      %v1458 = vsel %vm243, %v1450, %v1442
      %1459 = vrot.lane.b32.xlu0 %v1398, 111
      %v1460 = vpop.permute.xlu0 %1459
      %1461 = vrot.lane.b32.xlu0 %v1400, 111
      %v1462 = vpop.permute.xlu0 %1461
      %1463 = vrot.lane.b32.xlu0 %v1402, 111
      %v1464 = vpop.permute.xlu0 %1463
      %1465 = vrot.lane.b32.xlu0 %v1404, 111
      %v1466 = vpop.permute.xlu0 %1465
      %1467 = vrot.lane.b32.xlu0 %v1399, 111
      %v1468 = vpop.permute.xlu0 %1467
      %1469 = vrot.lane.b32.xlu0 %v1401, 111
      %v1470 = vpop.permute.xlu0 %1469
      %1471 = vrot.lane.b32.xlu0 %v1403, 111
      %v1472 = vpop.permute.xlu0 %1471
      %1473 = vrot.lane.b32.xlu0 %v1405, 111
      %v1474 = vpop.permute.xlu0 %1473
      %v1475 = vsel %vm250, %v1460, %v1468
      %v1476 = vsel %vm250, %v1462, %v1470
      %v1477 = vsel %vm250, %v1464, %v1472
      %v1478 = vsel %vm250, %v1466, %v1474
      %v1479 = vsel %vm250, %v1468, %v1460
      %v1480 = vsel %vm250, %v1470, %v1462
      %v1481 = vsel %vm250, %v1472, %v1464
      %v1482 = vsel %vm250, %v1474, %v1466
      %1483 = vmatprep.subr.mxu0 %v1399
      %1484 = vmatpush1.msra.mxu0 %v1398
      %1485 = vmatprep.subr.mxu0 %v1401
      %1486 = vmatpush1.msra.mxu0 %v1400
      %1487 = vmatprep.subr.mxu0 %v1403
      %1488 = vmatpush1.msra.mxu0 %v1402
      %1489 = vmatprep.subr.mxu0 %v1405
      %1490 = vmatpush1.msra.mxu0 %v1404
      %1491 = vmatprep.subr.mxu0 %v1431
      %1492 = vmatpush1.msra.mxu0 %v1427
      %1493 = vmatprep.subr.mxu0 %v1432
      %1494 = vmatpush1.msra.mxu0 %v1428
      %1495 = vmatprep.subr.mxu0 %v1433
      %1496 = vmatpush1.msra.mxu0 %v1429
      %1497 = vmatprep.subr.mxu0 %v1434
      %1498 = vmatpush1.msra.mxu0 %v1430
      %1499 = vmatprep.subr.mxu0 %v1455
      %1500 = vmatpush1.msra.mxu0 %v1451
      %1501 = vmatprep.subr.mxu0 %v1456
      %1502 = vmatpush1.msra.mxu0 %v1452
      %1503 = vmatprep.subr.mxu0 %v1457
      %1504 = vmatpush1.msra.mxu0 %v1453
      %1505 = vmatprep.subr.mxu0 %v1458
      %1506 = vmatpush1.msra.mxu0 %v1454
      %1507 = vmatprep.subr.mxu0 %v1479
      %1508 = vmatpush1.msra.mxu0 %v1475
      %1509 = vmatprep.subr.mxu0 %v1480
      %1510 = vmatpush1.msra.mxu0 %v1476
      %1511 = vmatprep.subr.mxu0 %v1481
      %1512 = vmatpush1.msra.mxu0 %v1477
      %1513 = vmatprep.subr.mxu0 %v1482
      %1514 = vmatpush1.msra.mxu0 %v1478
      %1515 = vmatprep.subr.mxu0 0.0
      %1516 = vmatpush1.msra.mxu0 0.0
      %1517 = vmatprep.subr.mxu0 0.0
      %1518 = vmatpush1.msra.mxu0 0.0
      %1519 = vmatprep.subr.mxu0 0.0
      %1520 = vmatpush1.msra.mxu0 0.0
      %1521 = vmatprep.subr.mxu0 0.0
      %1522 = vmatpush1.msra.mxu0 0.0
      %1523 = vmatprep.subr.mxu0 0.0
      %1524 = vmatpush1.msra.mxu0 0.0
      %1525 = vmatprep.subr.mxu0 0.0
      %1526 = vmatpush1.msra.mxu0 0.0
      %1527 = vmatprep.subr.mxu0 0.0
      %1528 = vmatpush1.msra.mxu0 0.0
      %1529 = vmatprep.subr.mxu0 0.0
      %1530 = vmatpush1.msra.mxu0 0.0
      %1531 = vmatprep.subr.mxu0 0.0
      %1532 = vmatpush1.msra.mxu0 0.0
      %1533 = vmatprep.subr.mxu0 0.0
      %1534 = vmatpush1.msra.mxu0 0.0
      %1535 = vmatprep.subr.mxu0 0.0
      %1536 = vmatpush1.msra.mxu0 0.0
      %1537 = vmatprep.subr.mxu0 0.0
      %1538 = vmatpush1.msra.mxu0 0.0
      %1539 = vmatprep.subr.mxu0 0.0
      %1540 = vmatpush1.msra.mxu0 0.0
      %1541 = vmatprep.subr.mxu0 0.0
      %1542 = vmatpush1.msra.mxu0 0.0
      %1543 = vmatprep.subr.mxu0 0.0
      %1544 = vmatpush1.msra.mxu0 0.0
      %1545 = vmatprep.subr.mxu0 0.0
      %1546 = vmatpush1.msra.mxu0 0.0
      %1547 = vmatprep.mubr.f32.mxu0 0.0
      %1548 = vmatmul.mubr.f32.gmra.mrb[0].mxu0 %v1407
      %v1549 = vpop.f32.mrb[0].mxu0
      %v1550 = vadd.f32 0.0, %v1549
      %v1551 = vpop.f32.mrb[0].mxu0
      %v1552 = vadd.f32 0.0, %v1551
      %1553 = vmatprep.mubr.f32.mxu0 0.0
      %1554 = vmatmul.mubr.f32.gmra.mrb[0].mxu0 %v1408
      %v1555 = vpop.f32.mrb[0].mxu0
      %v1556 = vadd.f32 0.0, %v1555
      %v1557 = vpop.f32.mrb[0].mxu0
      %v1558 = vadd.f32 0.0, %v1557
      %1559 = vmatprep.mubr.f32.mxu0 0.0
      %1560 = vmatmul.mubr.f32.gmra.mrb[0].mxu0 %v1409
      %v1561 = vpop.f32.mrb[0].mxu0
      %v1562 = vadd.f32 0.0, %v1561
      %v1563 = vpop.f32.mrb[0].mxu0
      %v1564 = vadd.f32 0.0, %v1563
      %1565 = vmatprep.mubr.f32.mxu0 0.0
      %1566 = vmatmul.mubr.f32.gmra.mrb[0].mxu0 %v1410
      %v1567 = vpop.f32.mrb[0].mxu0
      %v1568 = vadd.f32 0.0, %v1567
      %v1569 = vpop.f32.mrb[0].mxu0
      %v1570 = vadd.f32 0.0, %v1569
      %1571 = vdwg.mxu0
      %v1572 = vmax.f32 %v1550, 0.0
      %v1573 = vmax.f32 %v1552, 0.0
      %v1574 = vmax.f32 %v1556, 0.0
      %v1575 = vmax.f32 %v1558, 0.0
      %v1576 = vmax.f32 %v1562, 0.0
      %v1577 = vmax.f32 %v1564, 0.0
      %v1578 = vmax.f32 %v1568, 0.0
      %v1579 = vmax.f32 %v1570, 0.0
      %s1580 = scalar_lea.vmem %s2, 224
      %v1581 = vld [vmem:[%s1580] sm:$0xff]
      %v1582 = vld [vmem:[%s1580 + $0x8] sm:$0xff]
      %v1583 = vld [vmem:[%s1580 + $0x10] sm:$0xff]
      %v1584 = vld [vmem:[%s1580 + $0x18] sm:$0xff]
      %1585 = vrot.lane.b32.xlu0 %v1572, 127
      %v1586 = vpop.permute.xlu0 %1585
      %1587 = vrot.lane.b32.xlu0 %v1574, 127
      %v1588 = vpop.permute.xlu0 %1587
      %1589 = vrot.lane.b32.xlu0 %v1576, 127
      %v1590 = vpop.permute.xlu0 %1589
      %1591 = vrot.lane.b32.xlu0 %v1578, 127
      %v1592 = vpop.permute.xlu0 %1591
      %1593 = vrot.lane.b32.xlu0 %v1573, 127
      %v1594 = vpop.permute.xlu0 %1593
      %1595 = vrot.lane.b32.xlu0 %v1575, 127
      %v1596 = vpop.permute.xlu0 %1595
      %1597 = vrot.lane.b32.xlu0 %v1577, 127
      %v1598 = vpop.permute.xlu0 %1597
      %1599 = vrot.lane.b32.xlu0 %v1579, 127
      %v1600 = vpop.permute.xlu0 %1599
      %v1601 = vsel %vm236, %v1586, %v1594
      %v1602 = vsel %vm236, %v1588, %v1596
      %v1603 = vsel %vm236, %v1590, %v1598
      %v1604 = vsel %vm236, %v1592, %v1600
      %v1605 = vsel %vm236, %v1594, %v1586
      %v1606 = vsel %vm236, %v1596, %v1588
      %v1607 = vsel %vm236, %v1598, %v1590
      %v1608 = vsel %vm236, %v1600, %v1592
      %1609 = vrot.lane.b32.xlu0 %v1572, 112
      %v1610 = vpop.permute.xlu0 %1609
      %1611 = vrot.lane.b32.xlu0 %v1574, 112
      %v1612 = vpop.permute.xlu0 %1611
      %1613 = vrot.lane.b32.xlu0 %v1576, 112
      %v1614 = vpop.permute.xlu0 %1613
      %1615 = vrot.lane.b32.xlu0 %v1578, 112
      %v1616 = vpop.permute.xlu0 %1615
      %1617 = vrot.lane.b32.xlu0 %v1573, 112
      %v1618 = vpop.permute.xlu0 %1617
      %1619 = vrot.lane.b32.xlu0 %v1575, 112
      %v1620 = vpop.permute.xlu0 %1619
      %1621 = vrot.lane.b32.xlu0 %v1577, 112
      %v1622 = vpop.permute.xlu0 %1621
      %1623 = vrot.lane.b32.xlu0 %v1579, 112
      %v1624 = vpop.permute.xlu0 %1623
      %v1625 = vsel %vm243, %v1610, %v1618
      %v1626 = vsel %vm243, %v1612, %v1620
      %v1627 = vsel %vm243, %v1614, %v1622
      %v1628 = vsel %vm243, %v1616, %v1624
      %v1629 = vsel %vm243, %v1618, %v1610
      %v1630 = vsel %vm243, %v1620, %v1612
      %v1631 = vsel %vm243, %v1622, %v1614
      %v1632 = vsel %vm243, %v1624, %v1616
      %1633 = vrot.lane.b32.xlu0 %v1572, 111
      %v1634 = vpop.permute.xlu0 %1633
      %1635 = vrot.lane.b32.xlu0 %v1574, 111
      %v1636 = vpop.permute.xlu0 %1635
      %1637 = vrot.lane.b32.xlu0 %v1576, 111
      %v1638 = vpop.permute.xlu0 %1637
      %1639 = vrot.lane.b32.xlu0 %v1578, 111
      %v1640 = vpop.permute.xlu0 %1639
      %1641 = vrot.lane.b32.xlu0 %v1573, 111
      %v1642 = vpop.permute.xlu0 %1641
      %1643 = vrot.lane.b32.xlu0 %v1575, 111
      %v1644 = vpop.permute.xlu0 %1643
      %1645 = vrot.lane.b32.xlu0 %v1577, 111
      %v1646 = vpop.permute.xlu0 %1645
      %1647 = vrot.lane.b32.xlu0 %v1579, 111
      %v1648 = vpop.permute.xlu0 %1647
      %v1649 = vsel %vm250, %v1634, %v1642
      %v1650 = vsel %vm250, %v1636, %v1644
      %v1651 = vsel %vm250, %v1638, %v1646
      %v1652 = vsel %vm250, %v1640, %v1648
      %v1653 = vsel %vm250, %v1642, %v1634
      %v1654 = vsel %vm250, %v1644, %v1636
      %v1655 = vsel %vm250, %v1646, %v1638
      %v1656 = vsel %vm250, %v1648, %v1640
      %1657 = vmatprep.subr.mxu0 %v1573
      %1658 = vmatpush1.msra.mxu0 %v1572
      %1659 = vmatprep.subr.mxu0 %v1575
      %1660 = vmatpush1.msra.mxu0 %v1574
      %1661 = vmatprep.subr.mxu0 %v1577
      %1662 = vmatpush1.msra.mxu0 %v1576
      %1663 = vmatprep.subr.mxu0 %v1579
      %1664 = vmatpush1.msra.mxu0 %v1578
      %1665 = vmatprep.subr.mxu0 %v1605
      %1666 = vmatpush1.msra.mxu0 %v1601
      %1667 = vmatprep.subr.mxu0 %v1606
      %1668 = vmatpush1.msra.mxu0 %v1602
      %1669 = vmatprep.subr.mxu0 %v1607
      %1670 = vmatpush1.msra.mxu0 %v1603
      %1671 = vmatprep.subr.mxu0 %v1608
      %1672 = vmatpush1.msra.mxu0 %v1604
      %1673 = vmatprep.subr.mxu0 %v1629
      %1674 = vmatpush1.msra.mxu0 %v1625
      %1675 = vmatprep.subr.mxu0 %v1630
      %1676 = vmatpush1.msra.mxu0 %v1626
      %1677 = vmatprep.subr.mxu0 %v1631
      %1678 = vmatpush1.msra.mxu0 %v1627
      %1679 = vmatprep.subr.mxu0 %v1632
      %1680 = vmatpush1.msra.mxu0 %v1628
      %1681 = vmatprep.subr.mxu0 %v1653
      %1682 = vmatpush1.msra.mxu0 %v1649
      %1683 = vmatprep.subr.mxu0 %v1654
      %1684 = vmatpush1.msra.mxu0 %v1650
      %1685 = vmatprep.subr.mxu0 %v1655
      %1686 = vmatpush1.msra.mxu0 %v1651
      %1687 = vmatprep.subr.mxu0 %v1656
      %1688 = vmatpush1.msra.mxu0 %v1652
      %1689 = vmatprep.subr.mxu0 0.0
      %1690 = vmatpush1.msra.mxu0 0.0
      %1691 = vmatprep.subr.mxu0 0.0
      %1692 = vmatpush1.msra.mxu0 0.0
      %1693 = vmatprep.subr.mxu0 0.0
      %1694 = vmatpush1.msra.mxu0 0.0
      %1695 = vmatprep.subr.mxu0 0.0
      %1696 = vmatpush1.msra.mxu0 0.0
      %1697 = vmatprep.subr.mxu0 0.0
      %1698 = vmatpush1.msra.mxu0 0.0
      %1699 = vmatprep.subr.mxu0 0.0
      %1700 = vmatpush1.msra.mxu0 0.0
      %1701 = vmatprep.subr.mxu0 0.0
      %1702 = vmatpush1.msra.mxu0 0.0
      %1703 = vmatprep.subr.mxu0 0.0
      %1704 = vmatpush1.msra.mxu0 0.0
      %1705 = vmatprep.subr.mxu0 0.0
      %1706 = vmatpush1.msra.mxu0 0.0
      %1707 = vmatprep.subr.mxu0 0.0
      %1708 = vmatpush1.msra.mxu0 0.0
      %1709 = vmatprep.subr.mxu0 0.0
      %1710 = vmatpush1.msra.mxu0 0.0
      %1711 = vmatprep.subr.mxu0 0.0
      %1712 = vmatpush1.msra.mxu0 0.0
      %1713 = vmatprep.subr.mxu0 0.0
      %1714 = vmatpush1.msra.mxu0 0.0
      %1715 = vmatprep.subr.mxu0 0.0
      %1716 = vmatpush1.msra.mxu0 0.0
      %1717 = vmatprep.subr.mxu0 0.0
      %1718 = vmatpush1.msra.mxu0 0.0
      %1719 = vmatprep.subr.mxu0 0.0
      %1720 = vmatpush1.msra.mxu0 0.0
      %1721 = vmatprep.mubr.f32.mxu0 0.0
      %1722 = vmatmul.mubr.f32.gmra.mrb[0].mxu0 %v1581
      %v1723 = vpop.f32.mrb[0].mxu0
      %v1724 = vadd.f32 0.0, %v1723
      %v1725 = vpop.f32.mrb[0].mxu0
      %v1726 = vadd.f32 0.0, %v1725
      %1727 = vmatprep.mubr.f32.mxu0 0.0
      %1728 = vmatmul.mubr.f32.gmra.mrb[0].mxu0 %v1582
      %v1729 = vpop.f32.mrb[0].mxu0
      %v1730 = vadd.f32 0.0, %v1729
      %v1731 = vpop.f32.mrb[0].mxu0
      %v1732 = vadd.f32 0.0, %v1731
      %1733 = vmatprep.mubr.f32.mxu0 0.0
      %1734 = vmatmul.mubr.f32.gmra.mrb[0].mxu0 %v1583
      %v1735 = vpop.f32.mrb[0].mxu0
      %v1736 = vadd.f32 0.0, %v1735
      %v1737 = vpop.f32.mrb[0].mxu0
      %v1738 = vadd.f32 0.0, %v1737
      %1739 = vmatprep.mubr.f32.mxu0 0.0
      %1740 = vmatmul.mubr.f32.gmra.mrb[0].mxu0 %v1584
      %v1741 = vpop.f32.mrb[0].mxu0
      %v1742 = vadd.f32 0.0, %v1741
      %v1743 = vpop.f32.mrb[0].mxu0
      %v1744 = vadd.f32 0.0, %v1743
      %1745 = vdwg.mxu0
      %v1746 = vmax.f32 %v1724, 0.0
      %v1747 = vmax.f32 %v1726, 0.0
      %v1748 = vmax.f32 %v1730, 0.0
      %v1749 = vmax.f32 %v1732, 0.0
      %v1750 = vmax.f32 %v1736, 0.0
      %v1751 = vmax.f32 %v1738, 0.0
      %v1752 = vmax.f32 %v1742, 0.0
      %v1753 = vmax.f32 %v1744, 0.0
      %s1754 = scalar_lea.vmem %s2, 256
      %v1755 = vld [vmem:[%s1754] sm:$0xff]
      %v1756 = vld [vmem:[%s1754 + $0x8] sm:$0xff]
      %v1757 = vld [vmem:[%s1754 + $0x10] sm:$0xff]
      %v1758 = vld [vmem:[%s1754 + $0x18] sm:$0xff]
      %1759 = vrot.lane.b32.xlu0 %v1746, 127
      %v1760 = vpop.permute.xlu0 %1759
      %1761 = vrot.lane.b32.xlu0 %v1748, 127
      %v1762 = vpop.permute.xlu0 %1761
      %1763 = vrot.lane.b32.xlu0 %v1750, 127
      %v1764 = vpop.permute.xlu0 %1763
      %1765 = vrot.lane.b32.xlu0 %v1752, 127
      %v1766 = vpop.permute.xlu0 %1765
      %1767 = vrot.lane.b32.xlu0 %v1747, 127
      %v1768 = vpop.permute.xlu0 %1767
      %1769 = vrot.lane.b32.xlu0 %v1749, 127
      %v1770 = vpop.permute.xlu0 %1769
      %1771 = vrot.lane.b32.xlu0 %v1751, 127
      %v1772 = vpop.permute.xlu0 %1771
      %1773 = vrot.lane.b32.xlu0 %v1753, 127
      %v1774 = vpop.permute.xlu0 %1773
      %v1775 = vsel %vm236, %v1760, %v1768
      %v1776 = vsel %vm236, %v1762, %v1770
      %v1777 = vsel %vm236, %v1764, %v1772
      %v1778 = vsel %vm236, %v1766, %v1774
      %v1779 = vsel %vm236, %v1768, %v1760
      %v1780 = vsel %vm236, %v1770, %v1762
      %v1781 = vsel %vm236, %v1772, %v1764
      %v1782 = vsel %vm236, %v1774, %v1766
      %1783 = vrot.lane.b32.xlu0 %v1746, 112
      %v1784 = vpop.permute.xlu0 %1783
      %1785 = vrot.lane.b32.xlu0 %v1748, 112
      %v1786 = vpop.permute.xlu0 %1785
      %1787 = vrot.lane.b32.xlu0 %v1750, 112
      %v1788 = vpop.permute.xlu0 %1787
      %1789 = vrot.lane.b32.xlu0 %v1752, 112
      %v1790 = vpop.permute.xlu0 %1789
      %1791 = vrot.lane.b32.xlu0 %v1747, 112
      %v1792 = vpop.permute.xlu0 %1791
      %1793 = vrot.lane.b32.xlu0 %v1749, 112
      %v1794 = vpop.permute.xlu0 %1793
      %1795 = vrot.lane.b32.xlu0 %v1751, 112
      %v1796 = vpop.permute.xlu0 %1795
      %1797 = vrot.lane.b32.xlu0 %v1753, 112
      %v1798 = vpop.permute.xlu0 %1797
      %v1799 = vsel %vm243, %v1784, %v1792
      %v1800 = vsel %vm243, %v1786, %v1794
      %v1801 = vsel %vm243, %v1788, %v1796
      %v1802 = vsel %vm243, %v1790, %v1798
      %v1803 = vsel %vm243, %v1792, %v1784
      %v1804 = vsel %vm243, %v1794, %v1786
      %v1805 = vsel %vm243, %v1796, %v1788
      %v1806 = vsel %vm243, %v1798, %v1790
      %1807 = vrot.lane.b32.xlu0 %v1746, 111
      %v1808 = vpop.permute.xlu0 %1807
      %1809 = vrot.lane.b32.xlu0 %v1748, 111
      %v1810 = vpop.permute.xlu0 %1809
      %1811 = vrot.lane.b32.xlu0 %v1750, 111
      %v1812 = vpop.permute.xlu0 %1811
      %1813 = vrot.lane.b32.xlu0 %v1752, 111
      %v1814 = vpop.permute.xlu0 %1813
      %1815 = vrot.lane.b32.xlu0 %v1747, 111
      %v1816 = vpop.permute.xlu0 %1815
      %1817 = vrot.lane.b32.xlu0 %v1749, 111
      %v1818 = vpop.permute.xlu0 %1817
      %1819 = vrot.lane.b32.xlu0 %v1751, 111
      %v1820 = vpop.permute.xlu0 %1819
      %1821 = vrot.lane.b32.xlu0 %v1753, 111
      %v1822 = vpop.permute.xlu0 %1821
      %v1823 = vsel %vm250, %v1808, %v1816
      %v1824 = vsel %vm250, %v1810, %v1818
      %v1825 = vsel %vm250, %v1812, %v1820
      %v1826 = vsel %vm250, %v1814, %v1822
      %v1827 = vsel %vm250, %v1816, %v1808
      %v1828 = vsel %vm250, %v1818, %v1810
      %v1829 = vsel %vm250, %v1820, %v1812
      %v1830 = vsel %vm250, %v1822, %v1814
      %1831 = vmatprep.subr.mxu0 %v1747
      %1832 = vmatpush1.msra.mxu0 %v1746
      %1833 = vmatprep.subr.mxu0 %v1749
      %1834 = vmatpush1.msra.mxu0 %v1748
      %1835 = vmatprep.subr.mxu0 %v1751
      %1836 = vmatpush1.msra.mxu0 %v1750
      %1837 = vmatprep.subr.mxu0 %v1753
      %1838 = vmatpush1.msra.mxu0 %v1752
      %1839 = vmatprep.subr.mxu0 %v1779
      %1840 = vmatpush1.msra.mxu0 %v1775
      %1841 = vmatprep.subr.mxu0 %v1780
      %1842 = vmatpush1.msra.mxu0 %v1776
      %1843 = vmatprep.subr.mxu0 %v1781
      %1844 = vmatpush1.msra.mxu0 %v1777
      %1845 = vmatprep.subr.mxu0 %v1782
      %1846 = vmatpush1.msra.mxu0 %v1778
      %1847 = vmatprep.subr.mxu0 %v1803
      %1848 = vmatpush1.msra.mxu0 %v1799
      %1849 = vmatprep.subr.mxu0 %v1804
      %1850 = vmatpush1.msra.mxu0 %v1800
      %1851 = vmatprep.subr.mxu0 %v1805
      %1852 = vmatpush1.msra.mxu0 %v1801
      %1853 = vmatprep.subr.mxu0 %v1806
      %1854 = vmatpush1.msra.mxu0 %v1802
      %1855 = vmatprep.subr.mxu0 %v1827
      %1856 = vmatpush1.msra.mxu0 %v1823
      %1857 = vmatprep.subr.mxu0 %v1828
      %1858 = vmatpush1.msra.mxu0 %v1824
      %1859 = vmatprep.subr.mxu0 %v1829
      %1860 = vmatpush1.msra.mxu0 %v1825
      %1861 = vmatprep.subr.mxu0 %v1830
      %1862 = vmatpush1.msra.mxu0 %v1826
      %1863 = vmatprep.subr.mxu0 0.0
      %1864 = vmatpush1.msra.mxu0 0.0
      %1865 = vmatprep.subr.mxu0 0.0
      %1866 = vmatpush1.msra.mxu0 0.0
      %1867 = vmatprep.subr.mxu0 0.0
      %1868 = vmatpush1.msra.mxu0 0.0
      %1869 = vmatprep.subr.mxu0 0.0
      %1870 = vmatpush1.msra.mxu0 0.0
      %1871 = vmatprep.subr.mxu0 0.0
      %1872 = vmatpush1.msra.mxu0 0.0
      %1873 = vmatprep.subr.mxu0 0.0
      %1874 = vmatpush1.msra.mxu0 0.0
      %1875 = vmatprep.subr.mxu0 0.0
      %1876 = vmatpush1.msra.mxu0 0.0
      %1877 = vmatprep.subr.mxu0 0.0
      %1878 = vmatpush1.msra.mxu0 0.0
      %1879 = vmatprep.subr.mxu0 0.0
      %1880 = vmatpush1.msra.mxu0 0.0
      %1881 = vmatprep.subr.mxu0 0.0
      %1882 = vmatpush1.msra.mxu0 0.0
      %1883 = vmatprep.subr.mxu0 0.0
      %1884 = vmatpush1.msra.mxu0 0.0
      %1885 = vmatprep.subr.mxu0 0.0
      %1886 = vmatpush1.msra.mxu0 0.0
      %1887 = vmatprep.subr.mxu0 0.0
      %1888 = vmatpush1.msra.mxu0 0.0
      %1889 = vmatprep.subr.mxu0 0.0
      %1890 = vmatpush1.msra.mxu0 0.0
      %1891 = vmatprep.subr.mxu0 0.0
      %1892 = vmatpush1.msra.mxu0 0.0
      %1893 = vmatprep.subr.mxu0 0.0
      %1894 = vmatpush1.msra.mxu0 0.0
      %1895 = vmatprep.mubr.f32.mxu0 0.0
      %1896 = vmatmul.mubr.f32.gmra.mrb[0].mxu0 %v1755
      %v1897 = vpop.f32.mrb[0].mxu0
      %v1898 = vadd.f32 0.0, %v1897
      %v1899 = vpop.f32.mrb[0].mxu0
      %v1900 = vadd.f32 0.0, %v1899
      %1901 = vmatprep.mubr.f32.mxu0 0.0
      %1902 = vmatmul.mubr.f32.gmra.mrb[0].mxu0 %v1756
      %v1903 = vpop.f32.mrb[0].mxu0
      %v1904 = vadd.f32 0.0, %v1903
      %v1905 = vpop.f32.mrb[0].mxu0
      %v1906 = vadd.f32 0.0, %v1905
      %1907 = vmatprep.mubr.f32.mxu0 0.0
      %1908 = vmatmul.mubr.f32.gmra.mrb[0].mxu0 %v1757
      %v1909 = vpop.f32.mrb[0].mxu0
      %v1910 = vadd.f32 0.0, %v1909
      %v1911 = vpop.f32.mrb[0].mxu0
      %v1912 = vadd.f32 0.0, %v1911
      %1913 = vmatprep.mubr.f32.mxu0 0.0
      %1914 = vmatmul.mubr.f32.gmra.mrb[0].mxu0 %v1758
      %v1915 = vpop.f32.mrb[0].mxu0
      %v1916 = vadd.f32 0.0, %v1915
      %v1917 = vpop.f32.mrb[0].mxu0
      %v1918 = vadd.f32 0.0, %v1917
      %1919 = vdwg.mxu0
      %v1920 = vmax.f32 %v1898, 0.0
      %v1921 = vmax.f32 %v1900, 0.0
      %v1922 = vmax.f32 %v1904, 0.0
      %v1923 = vmax.f32 %v1906, 0.0
      %v1924 = vmax.f32 %v1910, 0.0
      %v1925 = vmax.f32 %v1912, 0.0
      %v1926 = vmax.f32 %v1916, 0.0
      %v1927 = vmax.f32 %v1918, 0.0
      %s1928 = scalar_lea.vmem %s2, 288
      %v1929 = vld [vmem:[%s1928] sm:$0xff]
      %v1930 = vld [vmem:[%s1928 + $0x8] sm:$0xff]
      %v1931 = vld [vmem:[%s1928 + $0x10] sm:$0xff]
      %v1932 = vld [vmem:[%s1928 + $0x18] sm:$0xff]
      %1933 = vrot.lane.b32.xlu0 %v1920, 127
      %v1934 = vpop.permute.xlu0 %1933
      %1935 = vrot.lane.b32.xlu0 %v1922, 127
      %v1936 = vpop.permute.xlu0 %1935
      %1937 = vrot.lane.b32.xlu0 %v1924, 127
      %v1938 = vpop.permute.xlu0 %1937
      %1939 = vrot.lane.b32.xlu0 %v1926, 127
      %v1940 = vpop.permute.xlu0 %1939
      %1941 = vrot.lane.b32.xlu0 %v1921, 127
      %v1942 = vpop.permute.xlu0 %1941
      %1943 = vrot.lane.b32.xlu0 %v1923, 127
      %v1944 = vpop.permute.xlu0 %1943
      %1945 = vrot.lane.b32.xlu0 %v1925, 127
      %v1946 = vpop.permute.xlu0 %1945
      %1947 = vrot.lane.b32.xlu0 %v1927, 127
      %v1948 = vpop.permute.xlu0 %1947
      %v1949 = vsel %vm236, %v1934, %v1942
      %v1950 = vsel %vm236, %v1936, %v1944
      %v1951 = vsel %vm236, %v1938, %v1946
      %v1952 = vsel %vm236, %v1940, %v1948
      %v1953 = vsel %vm236, %v1942, %v1934
      %v1954 = vsel %vm236, %v1944, %v1936
      %v1955 = vsel %vm236, %v1946, %v1938
      %v1956 = vsel %vm236, %v1948, %v1940
      %1957 = vrot.lane.b32.xlu0 %v1920, 112
      %v1958 = vpop.permute.xlu0 %1957
      %1959 = vrot.lane.b32.xlu0 %v1922, 112
      %v1960 = vpop.permute.xlu0 %1959
      %1961 = vrot.lane.b32.xlu0 %v1924, 112
      %v1962 = vpop.permute.xlu0 %1961
      %1963 = vrot.lane.b32.xlu0 %v1926, 112
      %v1964 = vpop.permute.xlu0 %1963
      %1965 = vrot.lane.b32.xlu0 %v1921, 112
      %v1966 = vpop.permute.xlu0 %1965
      %1967 = vrot.lane.b32.xlu0 %v1923, 112
      %v1968 = vpop.permute.xlu0 %1967
      %1969 = vrot.lane.b32.xlu0 %v1925, 112
      %v1970 = vpop.permute.xlu0 %1969
      %1971 = vrot.lane.b32.xlu0 %v1927, 112
      %v1972 = vpop.permute.xlu0 %1971
      %v1973 = vsel %vm243, %v1958, %v1966
      %v1974 = vsel %vm243, %v1960, %v1968
      %v1975 = vsel %vm243, %v1962, %v1970
      %v1976 = vsel %vm243, %v1964, %v1972
      %v1977 = vsel %vm243, %v1966, %v1958
      %v1978 = vsel %vm243, %v1968, %v1960
      %v1979 = vsel %vm243, %v1970, %v1962
      %v1980 = vsel %vm243, %v1972, %v1964
      %1981 = vrot.lane.b32.xlu0 %v1920, 111
      %v1982 = vpop.permute.xlu0 %1981
      %1983 = vrot.lane.b32.xlu0 %v1922, 111
      %v1984 = vpop.permute.xlu0 %1983
      %1985 = vrot.lane.b32.xlu0 %v1924, 111
      %v1986 = vpop.permute.xlu0 %1985
      %1987 = vrot.lane.b32.xlu0 %v1926, 111
      %v1988 = vpop.permute.xlu0 %1987
      %1989 = vrot.lane.b32.xlu0 %v1921, 111
      %v1990 = vpop.permute.xlu0 %1989
      %1991 = vrot.lane.b32.xlu0 %v1923, 111
      %v1992 = vpop.permute.xlu0 %1991
      %1993 = vrot.lane.b32.xlu0 %v1925, 111
      %v1994 = vpop.permute.xlu0 %1993
      %1995 = vrot.lane.b32.xlu0 %v1927, 111
      %v1996 = vpop.permute.xlu0 %1995
      %v1997 = vsel %vm250, %v1982, %v1990
      %v1998 = vsel %vm250, %v1984, %v1992
      %v1999 = vsel %vm250, %v1986, %v1994
      %v2000 = vsel %vm250, %v1988, %v1996
      %v2001 = vsel %vm250, %v1990, %v1982
      %v2002 = vsel %vm250, %v1992, %v1984
      %v2003 = vsel %vm250, %v1994, %v1986
      %v2004 = vsel %vm250, %v1996, %v1988
      %2005 = vmatprep.subr.mxu0 %v1921
      %2006 = vmatpush1.msra.mxu0 %v1920
      %2007 = vmatprep.subr.mxu0 %v1923
      %2008 = vmatpush1.msra.mxu0 %v1922
      %2009 = vmatprep.subr.mxu0 %v1925
      %2010 = vmatpush1.msra.mxu0 %v1924
      %2011 = vmatprep.subr.mxu0 %v1927
      %2012 = vmatpush1.msra.mxu0 %v1926
      %2013 = vmatprep.subr.mxu0 %v1953
      %2014 = vmatpush1.msra.mxu0 %v1949
      %2015 = vmatprep.subr.mxu0 %v1954
      %2016 = vmatpush1.msra.mxu0 %v1950
      %2017 = vmatprep.subr.mxu0 %v1955
      %2018 = vmatpush1.msra.mxu0 %v1951
      %2019 = vmatprep.subr.mxu0 %v1956
      %2020 = vmatpush1.msra.mxu0 %v1952
      %2021 = vmatprep.subr.mxu0 %v1977
      %2022 = vmatpush1.msra.mxu0 %v1973
      %2023 = vmatprep.subr.mxu0 %v1978
      %2024 = vmatpush1.msra.mxu0 %v1974
      %2025 = vmatprep.subr.mxu0 %v1979
      %2026 = vmatpush1.msra.mxu0 %v1975
      %2027 = vmatprep.subr.mxu0 %v1980
      %2028 = vmatpush1.msra.mxu0 %v1976
      %2029 = vmatprep.subr.mxu0 %v2001
      %2030 = vmatpush1.msra.mxu0 %v1997
      %2031 = vmatprep.subr.mxu0 %v2002
      %2032 = vmatpush1.msra.mxu0 %v1998
      %2033 = vmatprep.subr.mxu0 %v2003
      %2034 = vmatpush1.msra.mxu0 %v1999
      %2035 = vmatprep.subr.mxu0 %v2004
      %2036 = vmatpush1.msra.mxu0 %v2000
      %2037 = vmatprep.subr.mxu0 0.0
      %2038 = vmatpush1.msra.mxu0 0.0
      %2039 = vmatprep.subr.mxu0 0.0
      %2040 = vmatpush1.msra.mxu0 0.0
      %2041 = vmatprep.subr.mxu0 0.0
      %2042 = vmatpush1.msra.mxu0 0.0
      %2043 = vmatprep.subr.mxu0 0.0
      %2044 = vmatpush1.msra.mxu0 0.0
      %2045 = vmatprep.subr.mxu0 0.0
      %2046 = vmatpush1.msra.mxu0 0.0
      %2047 = vmatprep.subr.mxu0 0.0
      %2048 = vmatpush1.msra.mxu0 0.0
      %2049 = vmatprep.subr.mxu0 0.0
      %2050 = vmatpush1.msra.mxu0 0.0
      %2051 = vmatprep.subr.mxu0 0.0
      %2052 = vmatpush1.msra.mxu0 0.0
      %2053 = vmatprep.subr.mxu0 0.0
      %2054 = vmatpush1.msra.mxu0 0.0
      %2055 = vmatprep.subr.mxu0 0.0
      %2056 = vmatpush1.msra.mxu0 0.0
      %2057 = vmatprep.subr.mxu0 0.0
      %2058 = vmatpush1.msra.mxu0 0.0
      %2059 = vmatprep.subr.mxu0 0.0
      %2060 = vmatpush1.msra.mxu0 0.0
      %2061 = vmatprep.subr.mxu0 0.0
      %2062 = vmatpush1.msra.mxu0 0.0
      %2063 = vmatprep.subr.mxu0 0.0
      %2064 = vmatpush1.msra.mxu0 0.0
      %2065 = vmatprep.subr.mxu0 0.0
      %2066 = vmatpush1.msra.mxu0 0.0
      %2067 = vmatprep.subr.mxu0 0.0
      %2068 = vmatpush1.msra.mxu0 0.0
      %2069 = vmatprep.mubr.f32.mxu0 0.0
      %2070 = vmatmul.mubr.f32.gmra.mrb[0].mxu0 %v1929
      %v2071 = vpop.f32.mrb[0].mxu0
      %v2072 = vadd.f32 0.0, %v2071
      %v2073 = vpop.f32.mrb[0].mxu0
      %v2074 = vadd.f32 0.0, %v2073
      %2075 = vmatprep.mubr.f32.mxu0 0.0
      %2076 = vmatmul.mubr.f32.gmra.mrb[0].mxu0 %v1930
      %v2077 = vpop.f32.mrb[0].mxu0
      %v2078 = vadd.f32 0.0, %v2077
      %v2079 = vpop.f32.mrb[0].mxu0
      %v2080 = vadd.f32 0.0, %v2079
      %2081 = vmatprep.mubr.f32.mxu0 0.0
      %2082 = vmatmul.mubr.f32.gmra.mrb[0].mxu0 %v1931
      %v2083 = vpop.f32.mrb[0].mxu0
      %v2084 = vadd.f32 0.0, %v2083
      %v2085 = vpop.f32.mrb[0].mxu0
      %v2086 = vadd.f32 0.0, %v2085
      %2087 = vmatprep.mubr.f32.mxu0 0.0
      %2088 = vmatmul.mubr.f32.gmra.mrb[0].mxu0 %v1932
      %v2089 = vpop.f32.mrb[0].mxu0
      %v2090 = vadd.f32 0.0, %v2089
      %v2091 = vpop.f32.mrb[0].mxu0
      %v2092 = vadd.f32 0.0, %v2091
      %2093 = vdwg.mxu0
      %v2094 = vmax.f32 %v2072, 0.0
      %v2095 = vmax.f32 %v2074, 0.0
      %v2096 = vmax.f32 %v2078, 0.0
      %v2097 = vmax.f32 %v2080, 0.0
      %v2098 = vmax.f32 %v2084, 0.0
      %v2099 = vmax.f32 %v2086, 0.0
      %v2100 = vmax.f32 %v2090, 0.0
      %v2101 = vmax.f32 %v2092, 0.0
      %v2102 = vld [vmem:[%s3] sm:$0x1]
      %2103 = vrot.lane.b32.xlu0 %v2094, 127
      %v2104 = vpop.permute.xlu0 %2103
      %2105 = vrot.lane.b32.xlu0 %v2096, 127
      %v2106 = vpop.permute.xlu0 %2105
      %2107 = vrot.lane.b32.xlu0 %v2098, 127
      %v2108 = vpop.permute.xlu0 %2107
      %2109 = vrot.lane.b32.xlu0 %v2100, 127
      %v2110 = vpop.permute.xlu0 %2109
      %2111 = vrot.lane.b32.xlu0 %v2095, 127
      %v2112 = vpop.permute.xlu0 %2111
      %2113 = vrot.lane.b32.xlu0 %v2097, 127
      %v2114 = vpop.permute.xlu0 %2113
      %2115 = vrot.lane.b32.xlu0 %v2099, 127
      %v2116 = vpop.permute.xlu0 %2115
      %2117 = vrot.lane.b32.xlu0 %v2101, 127
      %v2118 = vpop.permute.xlu0 %2117
      %v2119 = vsel %vm236, %v2104, %v2112
      %v2120 = vsel %vm236, %v2106, %v2114
      %v2121 = vsel %vm236, %v2108, %v2116
      %v2122 = vsel %vm236, %v2110, %v2118
      %v2123 = vsel %vm236, %v2112, %v2104
      %v2124 = vsel %vm236, %v2114, %v2106
      %v2125 = vsel %vm236, %v2116, %v2108
      %v2126 = vsel %vm236, %v2118, %v2110
      %2127 = vrot.lane.b32.xlu0 %v2094, 112
      %v2128 = vpop.permute.xlu0 %2127
      %2129 = vrot.lane.b32.xlu0 %v2096, 112
      %v2130 = vpop.permute.xlu0 %2129
      %2131 = vrot.lane.b32.xlu0 %v2098, 112
      %v2132 = vpop.permute.xlu0 %2131
      %2133 = vrot.lane.b32.xlu0 %v2100, 112
      %v2134 = vpop.permute.xlu0 %2133
      %2135 = vrot.lane.b32.xlu0 %v2095, 112
      %v2136 = vpop.permute.xlu0 %2135
      %2137 = vrot.lane.b32.xlu0 %v2097, 112
      %v2138 = vpop.permute.xlu0 %2137
      %2139 = vrot.lane.b32.xlu0 %v2099, 112
      %v2140 = vpop.permute.xlu0 %2139
      %2141 = vrot.lane.b32.xlu0 %v2101, 112
      %v2142 = vpop.permute.xlu0 %2141
      %v2143 = vsel %vm243, %v2128, %v2136
      %v2144 = vsel %vm243, %v2130, %v2138
      %v2145 = vsel %vm243, %v2132, %v2140
      %v2146 = vsel %vm243, %v2134, %v2142
      %v2147 = vsel %vm243, %v2136, %v2128
      %v2148 = vsel %vm243, %v2138, %v2130
      %v2149 = vsel %vm243, %v2140, %v2132
      %v2150 = vsel %vm243, %v2142, %v2134
      %2151 = vrot.lane.b32.xlu0 %v2094, 111
      %v2152 = vpop.permute.xlu0 %2151
      %2153 = vrot.lane.b32.xlu0 %v2096, 111
      %v2154 = vpop.permute.xlu0 %2153
      %2155 = vrot.lane.b32.xlu0 %v2098, 111
      %v2156 = vpop.permute.xlu0 %2155
      %2157 = vrot.lane.b32.xlu0 %v2100, 111
      %v2158 = vpop.permute.xlu0 %2157
      %2159 = vrot.lane.b32.xlu0 %v2095, 111
      %v2160 = vpop.permute.xlu0 %2159
      %2161 = vrot.lane.b32.xlu0 %v2097, 111
      %v2162 = vpop.permute.xlu0 %2161
      %2163 = vrot.lane.b32.xlu0 %v2099, 111
      %v2164 = vpop.permute.xlu0 %2163
      %2165 = vrot.lane.b32.xlu0 %v2101, 111
      %v2166 = vpop.permute.xlu0 %2165
      %v2167 = vsel %vm250, %v2152, %v2160
      %v2168 = vsel %vm250, %v2154, %v2162
      %v2169 = vsel %vm250, %v2156, %v2164
      %v2170 = vsel %vm250, %v2158, %v2166
      %v2171 = vsel %vm250, %v2160, %v2152
      %v2172 = vsel %vm250, %v2162, %v2154
      %v2173 = vsel %vm250, %v2164, %v2156
      %v2174 = vsel %vm250, %v2166, %v2158
      %s2175 = sld [smem:[#allocation2]]
      %v2176 = vstv %s2175
      %2177 = vmatprep.subr.mxu0 %v2095
      %2178 = vmatpush1.msra.mxu0 %v2094
      %2179 = vmatprep.subr.mxu0 %v2097
      %2180 = vmatpush1.msra.mxu0 %v2096
      %2181 = vmatprep.subr.mxu0 %v2099
      %2182 = vmatpush1.msra.mxu0 %v2098
      %2183 = vmatprep.subr.mxu0 %v2101
      %2184 = vmatpush1.msra.mxu0 %v2100
      %2185 = vmatprep.subr.mxu0 %v2123
      %2186 = vmatpush1.msra.mxu0 %v2119
      %2187 = vmatprep.subr.mxu0 %v2124
      %2188 = vmatpush1.msra.mxu0 %v2120
      %2189 = vmatprep.subr.mxu0 %v2125
      %2190 = vmatpush1.msra.mxu0 %v2121
      %2191 = vmatprep.subr.mxu0 %v2126
      %2192 = vmatpush1.msra.mxu0 %v2122
      %2193 = vmatprep.subr.mxu0 %v2147
      %2194 = vmatpush1.msra.mxu0 %v2143
      %2195 = vmatprep.subr.mxu0 %v2148
      %2196 = vmatpush1.msra.mxu0 %v2144
      %2197 = vmatprep.subr.mxu0 %v2149
      %2198 = vmatpush1.msra.mxu0 %v2145
      %2199 = vmatprep.subr.mxu0 %v2150
      %2200 = vmatpush1.msra.mxu0 %v2146
      %2201 = vmatprep.subr.mxu0 %v2171
      %2202 = vmatpush1.msra.mxu0 %v2167
      %2203 = vmatprep.subr.mxu0 %v2172
      %2204 = vmatpush1.msra.mxu0 %v2168
      %2205 = vmatprep.subr.mxu0 %v2173
      %2206 = vmatpush1.msra.mxu0 %v2169
      %2207 = vmatprep.subr.mxu0 %v2174
      %2208 = vmatpush1.msra.mxu0 %v2170
      %2209 = vmatprep.subr.mxu0 0.0
      %2210 = vmatpush1.msra.mxu0 0.0
      %2211 = vmatprep.subr.mxu0 0.0
      %2212 = vmatpush1.msra.mxu0 0.0
      %2213 = vmatprep.subr.mxu0 0.0
      %2214 = vmatpush1.msra.mxu0 0.0
      %2215 = vmatprep.subr.mxu0 0.0
      %2216 = vmatpush1.msra.mxu0 0.0
      %2217 = vmatprep.subr.mxu0 0.0
      %2218 = vmatpush1.msra.mxu0 0.0
      %2219 = vmatprep.subr.mxu0 0.0
      %2220 = vmatpush1.msra.mxu0 0.0
      %2221 = vmatprep.subr.mxu0 0.0
      %2222 = vmatpush1.msra.mxu0 0.0
      %2223 = vmatprep.subr.mxu0 0.0
      %2224 = vmatpush1.msra.mxu0 0.0
      %2225 = vmatprep.subr.mxu0 0.0
      %2226 = vmatpush1.msra.mxu0 0.0
      %2227 = vmatprep.subr.mxu0 0.0
      %2228 = vmatpush1.msra.mxu0 0.0
      %2229 = vmatprep.subr.mxu0 0.0
      %2230 = vmatpush1.msra.mxu0 0.0
      %2231 = vmatprep.subr.mxu0 0.0
      %2232 = vmatpush1.msra.mxu0 0.0
      %2233 = vmatprep.subr.mxu0 0.0
      %2234 = vmatpush1.msra.mxu0 0.0
      %2235 = vmatprep.subr.mxu0 0.0
      %2236 = vmatpush1.msra.mxu0 0.0
      %2237 = vmatprep.subr.mxu0 0.0
      %2238 = vmatpush1.msra.mxu0 0.0
      %2239 = vmatprep.subr.mxu0 0.0
      %2240 = vmatpush1.msra.mxu0 0.0
      %2241 = vmatprep.mubr.f32.mxu0 0.0
      %2242 = vmatmul.mubr.f32.gmra.mrb[0].mxu0 %v2102
      %v2243 = vpop.f32.mrb[0].mxu0
      %v2244 = vadd.f32 %v2176, %v2243
      %v2245 = vpop.f32.mrb[0].mxu0
      %v2246 = vadd.f32 %v2176, %v2245
      %2247 = vdwg.mxu0
      %v2250 = vcombine.low %v2244, %v2246
      %v2252 = vunpack.c.l.s4 1966171168
      %v2253 = vunpack.c.0.s8 %v2252
      %v2254 = vlaneseq
      %v2255 = vshrl.u32 %v2254, 7
      %v2256 = vsub.s32 %v2253, %v2255
      %v2257 = vrot.slane %v2250, %v2256
      %v2259 = vunpack.c.l.s4 1966171168
      %v2260 = vunpack.c.0.s8 %v2259
      %v2261 = vlaneseq
      %v2262 = vshrl.u32 %v2261, 7
      %v2263 = vsub.s32 %v2260, %v2262
      %v2264 = vrot.slane %v2257, %v2263
      %v2266 = vlaneseq
      %vm2267 = vcmp.ge.s32.totalorder %v2266, 0
      %vm2268 = vcmp.lt.s32.totalorder %v2266, 256
      %vm2269 = vmand %vm2267, %vm2268
      %2270 = vst.msk [vmem:[%s223] sm:$0x3] %vm2269, %v2264
      %p2271 = scmp.lt.s32.totalorder %s17, 1
      %s2272 = scalar_select %p2271, %s17, 1
      %s2273 = smul.addr %s2272, 2
      %s2274 = scalar_lea.vmem %s5, %s2273
      // Predicated region
      $region41: #{_lambda_.1} parent=39 // pred_check
        %p2275 = pneg %p145
      $region42: #{_lambda_.1} parent=39 // pred_check_branch
        %2277 = sbr.rel (%p2275) target = $region44
      $region43: #{_lambda_.1} parent=39 // pred_region
        _
      $region44: #{_lambda_.1} parent=39 // pred_fallthru
        _
    $region40: #{_lambda_.1} parent=5 // pred_fallthru
      _
    %p2278 = scmp.le.s32.totalorder 2, %s12
    // Predicated region
    $region45: #{_lambda_.1} parent=5 // pred_check
      %p2279 = pneg %p2278
    $region46: #{_lambda_.1} parent=5 // pred_check_branch
      %2281 = sbr.rel (%p2279) target = $region48
    $region47: #{_lambda_.1} parent=5 // pred_region
      %s2282 = ssub.s32 %s12, 2
      // Predicated region
      $region49: #{_lambda_.1} parent=47 // pred_check
        %p2283 = pneg %p151
      $region50: #{_lambda_.1} parent=47 // pred_check_branch
        %2285 = sbr.rel (%p2283) target = $region52
      $region51: #{_lambda_.1} parent=47 // pred_region
        %p2286 = scmp.lt.s32.totalorder %s18, 1
        %s2287 = scalar_select %p2286, %s18, 1
        %s2288 = smul.addr %s2287, 2
        %s2289 = scalar_lea.vmem %s5, %s2288
      $region52: #{_lambda_.1} parent=47 // pred_fallthru
        _
    $region48: #{_lambda_.1} parent=5 // pred_fallthru
      _
  $region6: #{_lambda_.1} parent=0 // loop_footer
    %s16 = sadd.s32 1, %s12
  $region7: #{_lambda_.1} parent=0 // loop_footer_branch
    %11 = sbr.rel target = $region3
  $region8: #{_lambda_.1} parent=0 // loop_exit
    _

</llo_original>
